<compile_context>
chip_gen: v7x
topology: tpu7x:2x2x1
jax: 0.10.0
libtpu: 0.0.40
codegen_flags: <defaults>
</compile_context>

<pallas_src>
import math
import jax
import jax.numpy as jnp
from jax.experimental import pallas as pl
from jax.experimental.pallas import tpu as pltpu

# Logical (PyTorch) layer dims: (in_features, out_features).
LAYER_DIMS = [(784, 512), (512, 256), (256, 128), (128, 64), (64, 10)]

_IN = LAYER_DIMS[0][0]      # 784 (fed unpadded; full-extent last dim)
_OUT_PAD = 128              # final logits padded 10 -> 128 for a lane-dense store


def _round_up(x, m):
    return ((x + m - 1) // m) * m


def _mlp_kernel(x_ref,
                w1_ref, b1_ref,
                w2_ref, b2_ref,
                w3_ref, b3_ref,
                w4_ref, b4_ref,
                w5_ref, b5_ref,
                o_ref):
    # x_ref: (tile_b, 784) f32. Weights bf16, biases f32. Accumulate in fp32.
    h = x_ref[...].astype(jnp.bfloat16)
    h = jnp.maximum(
        jnp.dot(h, w1_ref[...], preferred_element_type=jnp.float32) + b1_ref[...], 0.0)
    h = jnp.maximum(
        jnp.dot(h.astype(jnp.bfloat16), w2_ref[...],
                preferred_element_type=jnp.float32) + b2_ref[...], 0.0)
    h = jnp.maximum(
        jnp.dot(h.astype(jnp.bfloat16), w3_ref[...],
                preferred_element_type=jnp.float32) + b3_ref[...], 0.0)
    h = jnp.maximum(
        jnp.dot(h.astype(jnp.bfloat16), w4_ref[...],
                preferred_element_type=jnp.float32) + b4_ref[...], 0.0)
    # f5: Linear only. Output is 128-wide (cols 10..127 are zero-padded weights/bias),
    # stored as bf16 for half the output HBM traffic.
    o_ref[...] = (
        jnp.dot(h.astype(jnp.bfloat16), w5_ref[...],
                preferred_element_type=jnp.float32) + b5_ref[...]
    ).astype(o_ref.dtype)


def init_params(key):
    """Deterministic init mimicking torch.nn.Linear default U(-1/sqrt(in), 1/sqrt(in)).

    Weights are stored as (in_features, out_features) so the kernel computes
    x @ W + b, identical to PyTorch's x @ W_torch.T + b with W = W_torch.T.
    """
    params = []
    for (din, dout) in LAYER_DIMS:
        key, kw, kb = jax.random.split(key, 3)
        bound = 1.0 / math.sqrt(din)
        w = jax.random.uniform(kw, (din, dout), jnp.float32, -bound, bound)
        b = jax.random.uniform(kb, (1, dout), jnp.float32, -bound, bound)
        params.append((w, b))
    return params


def _prepare_params(params):
    """Weights -> bf16 at natural shapes; only the last layer's out dim is padded
    10 -> 128 (with zeros) so the output block is lane-dense. Biases stay f32."""
    flat = []
    last = len(params) - 1
    for idx, (w, b) in enumerate(params):
        if idx == last:
            w = jnp.pad(w, ((0, 0), (0, _OUT_PAD - w.shape[1])))
            b = jnp.pad(b, ((0, 0), (0, _OUT_PAD - b.shape[1])))
        flat += [w.astype(jnp.bfloat16), b.astype(jnp.float32)]
    return flat


def _choose_tile(B, tile_b, align=16):
    """Balanced batch tiling.

    - tile is a multiple of 16 (sublane packing for the bf16 output block),
    - the number of grid steps is >= 2 whenever the batch can form two aligned
      tiles (so the "parallel" batch axis shards across both v7x TensorCores),
    - tile ~= cdiv(B, n_steps) so batch-padding waste is bounded by <align rows
      per tile instead of padding B up to a fixed multiple of tile_b.
    """
    tgt = max(min(tile_b, B), 1)
    n_steps = pl.cdiv(B, tgt)
    if n_steps < 2 and B >= 2 * align:
        n_steps = 2
    tile = _round_up(pl.cdiv(B, n_steps), align)
    return max(tile, align)


def net_forward(x, params, tile_b=512):
    """x: (B, 1, 28, 28) float32 (NCHW). Returns (B, 10) float32 logits."""
    B = x.shape[0]
    # Flatten (matches torch x.view(-1, 784)); no pad, no dtype re-materialization.
    x2 = x.reshape(B, _IN).astype(jnp.float32)

    tile = _choose_tile(B, tile_b)
    B_pad = _round_up(B, tile)
    if B_pad != B:
        x2 = jnp.pad(x2, ((0, B_pad - B), (0, 0)))

    flat_params = _prepare_params(params)

    # One grid axis over batch tiles; all weights/biases use a constant block
    # index so they stay resident in VMEM across every grid step.
    in_specs = [pl.BlockSpec((tile, _IN), lambda i: (i, 0))]
    for p in flat_params:
        in_specs.append(pl.BlockSpec(p.shape, lambda i: (0, 0)))

    # Advisory cost estimate so XLA schedules the surrounding reshape/slice well.
    kn = [(784, 512), (512, 256), (256, 128), (128, 64), (64, _OUT_PAD)]
    flops = 2 * B_pad * sum(k * n for k, n in kn)
    bytes_accessed = (
        B_pad * _IN * 4
        + sum(int(p.size) * p.dtype.itemsize for p in flat_params)
        + B_pad * _OUT_PAD * 2)
    cost = pl.CostEstimate(flops=flops, transcendentals=0,
                           bytes_accessed=bytes_accessed)

    out = pl.pallas_call(
        _mlp_kernel,
        out_shape=jax.ShapeDtypeStruct((B_pad, _OUT_PAD), jnp.bfloat16),
        grid_spec=pltpu.PrefetchScalarGridSpec(
            num_scalar_prefetch=0,
            grid=(B_pad // tile,),
            in_specs=in_specs,
            out_specs=pl.BlockSpec((tile, _OUT_PAD), lambda i: (i, 0)),
        ),
        compiler_params=pltpu.CompilerParams(
            dimension_semantics=("parallel",)),
        cost_estimate=cost,
    )(x2, *flat_params)

    # Drop batch padding and the 118 zero lane-padding columns of the logits.
    return out[:B, :10].astype(jnp.float32)


def net_forward_ref(x, params):
    """Pure-JAX reference matching the kernel's bf16-weight / fp32-accum numerics.

    Note: activations are cast to bf16 before every matmul (by design), so results
    differ from a pure-f32 PyTorch forward by more than the usual f32 tolerance.
    """
    h = x.reshape(x.shape[0], _IN).astype(jnp.float32)
    for idx, (w, b) in enumerate(params):
        h = jnp.dot(h.astype(jnp.bfloat16), w.astype(jnp.bfloat16),
                    preferred_element_type=jnp.float32) + b
        if idx < len(params) - 1:
            h = jnp.maximum(h, 0.0)
    return h


if __name__ == "__main__":
    key = jax.random.PRNGKey(0)
    kx, kp = jax.random.split(key)

    params = init_params(kp)
    x = jax.random.normal(kx, (8, 1, 28, 28), jnp.float32)   # small MNIST-like batch

    y = net_forward(x, params)
    y = jax.block_until_ready(y)

    y_ref = net_forward_ref(x, params)
    assert y.shape == (8, 10)
    assert jnp.allclose(y, y_ref, atol=2e-2, rtol=2e-2), "mismatch vs JAX reference"

    print("KERNEL_OK")
</pallas_src>

<mosaic_0001>
module attributes {stable_mosaic.version = 11 : i64} {
  func.func @_mlp_kernel(%arg0: i32, %arg1: memref<16x784xf32, #tpu.memory_space<vmem>>, %arg2: memref<784x512xbf16, #tpu.memory_space<vmem>>, %arg3: memref<1x512xf32, #tpu.memory_space<vmem>>, %arg4: memref<512x256xbf16, #tpu.memory_space<vmem>>, %arg5: memref<1x256xf32, #tpu.memory_space<vmem>>, %arg6: memref<256x128xbf16, #tpu.memory_space<vmem>>, %arg7: memref<1x128xf32, #tpu.memory_space<vmem>>, %arg8: memref<128x64xbf16, #tpu.memory_space<vmem>>, %arg9: memref<1x64xf32, #tpu.memory_space<vmem>>, %arg10: memref<64x128xbf16, #tpu.memory_space<vmem>>, %arg11: memref<1x128xf32, #tpu.memory_space<vmem>>, %arg12: memref<16x128xbf16, #tpu.memory_space<vmem>>) attributes {dimension_semantics = [#tpu.dimension_semantics<parallel>], iteration_bounds = array<i64: 1>, scalar_prefetch = 0 : i64, scratch_operands = 0 : i64, tpu.core_type = #tpu.core_type<tc>, window_params = [{transform_indices = @transform_0, window_bounds = array<i64: 16, 784>}, {pipeline_mode = #tpu.pipeline_mode<synchronous>, transform_indices = @transform_1, window_bounds = array<i64: 784, 512>}, {pipeline_mode = #tpu.pipeline_mode<synchronous>, transform_indices = @transform_2, window_bounds = array<i64: 1, 512>}, {pipeline_mode = #tpu.pipeline_mode<synchronous>, transform_indices = @transform_3, window_bounds = array<i64: 512, 256>}, {pipeline_mode = #tpu.pipeline_mode<synchronous>, transform_indices = @transform_4, window_bounds = array<i64: 1, 256>}, {pipeline_mode = #tpu.pipeline_mode<synchronous>, transform_indices = @transform_5, window_bounds = array<i64: 256, 128>}, {pipeline_mode = #tpu.pipeline_mode<synchronous>, transform_indices = @transform_6, window_bounds = array<i64: 1, 128>}, {pipeline_mode = #tpu.pipeline_mode<synchronous>, transform_indices = @transform_7, window_bounds = array<i64: 128, 64>}, {pipeline_mode = #tpu.pipeline_mode<synchronous>, transform_indices = @transform_8, window_bounds = array<i64: 1, 64>}, {pipeline_mode = #tpu.pipeline_mode<synchronous>, transform_indices = @transform_9, window_bounds = array<i64: 64, 128>}, {pipeline_mode = #tpu.pipeline_mode<synchronous>, transform_indices = @transform_10, window_bounds = array<i64: 1, 128>}, {transform_indices = @transform_11, window_bounds = array<i64: 16, 128>}]} {
    %c0 = arith.constant 0 : index
    %c0_0 = arith.constant 0 : index
    %0 = vector.load %arg1[%c0, %c0_0] : memref<16x784xf32, #tpu.memory_space<vmem>>, vector<16x784xf32>
    %1 = arith.truncf %0 : vector<16x784xf32> to vector<16x784xbf16>
    %c0_1 = arith.constant 0 : index
    %c0_2 = arith.constant 0 : index
    %2 = vector.load %arg2[%c0_1, %c0_2] : memref<784x512xbf16, #tpu.memory_space<vmem>>, vector<784x512xbf16>
    %cst = arith.constant dense<0.000000e+00> : vector<16x512xf32>
    %3 = tpu.matmul %1, %2, %cst {dimension_numbers = #tpu.dot_dimension_numbers<[1], [0], [0], [1], [0, 0, 1, 1], [], []>} : vector<16x784xbf16>, vector<784x512xbf16>, vector<16x512xf32> -> vector<16x512xf32>
    %c0_3 = arith.constant 0 : index
    %c0_4 = arith.constant 0 : index
    %4 = vector.load %arg3[%c0_3, %c0_4] : memref<1x512xf32, #tpu.memory_space<vmem>>, vector<1x512xf32>
    %5 = vector.broadcast %4 : vector<1x512xf32> to vector<16x512xf32>
    %6 = arith.addf %3, %5 : vector<16x512xf32>
    %cst_5 = arith.constant 0.000000e+00 : f32
    %7 = vector.broadcast %cst_5 : f32 to vector<16x512xf32>
    %8 = arith.maximumf %6, %7 : vector<16x512xf32>
    %9 = arith.truncf %8 : vector<16x512xf32> to vector<16x512xbf16>
    %c0_6 = arith.constant 0 : index
    %c0_7 = arith.constant 0 : index
    %10 = vector.load %arg4[%c0_6, %c0_7] : memref<512x256xbf16, #tpu.memory_space<vmem>>, vector<512x256xbf16>
    %cst_8 = arith.constant dense<0.000000e+00> : vector<16x256xf32>
    %11 = tpu.matmul %9, %10, %cst_8 {dimension_numbers = #tpu.dot_dimension_numbers<[1], [0], [0], [1], [0, 0, 1, 1], [], []>} : vector<16x512xbf16>, vector<512x256xbf16>, vector<16x256xf32> -> vector<16x256xf32>
    %c0_9 = arith.constant 0 : index
    %c0_10 = arith.constant 0 : index
    %12 = vector.load %arg5[%c0_9, %c0_10] : memref<1x256xf32, #tpu.memory_space<vmem>>, vector<1x256xf32>
    %13 = vector.broadcast %12 : vector<1x256xf32> to vector<16x256xf32>
    %14 = arith.addf %11, %13 : vector<16x256xf32>
    %cst_11 = arith.constant 0.000000e+00 : f32
    %15 = vector.broadcast %cst_11 : f32 to vector<16x256xf32>
    %16 = arith.maximumf %14, %15 : vector<16x256xf32>
    %17 = arith.truncf %16 : vector<16x256xf32> to vector<16x256xbf16>
    %c0_12 = arith.constant 0 : index
    %c0_13 = arith.constant 0 : index
    %18 = vector.load %arg6[%c0_12, %c0_13] : memref<256x128xbf16, #tpu.memory_space<vmem>>, vector<256x128xbf16>
    %cst_14 = arith.constant dense<0.000000e+00> : vector<16x128xf32>
    %19 = tpu.matmul %17, %18, %cst_14 {dimension_numbers = #tpu.dot_dimension_numbers<[1], [0], [0], [1], [0, 0, 1, 1], [], []>} : vector<16x256xbf16>, vector<256x128xbf16>, vector<16x128xf32> -> vector<16x128xf32>
    %c0_15 = arith.constant 0 : index
    %c0_16 = arith.constant 0 : index
    %20 = vector.load %arg7[%c0_15, %c0_16] : memref<1x128xf32, #tpu.memory_space<vmem>>, vector<1x128xf32>
    %21 = vector.broadcast %20 : vector<1x128xf32> to vector<16x128xf32>
    %22 = arith.addf %19, %21 : vector<16x128xf32>
    %cst_17 = arith.constant 0.000000e+00 : f32
    %23 = vector.broadcast %cst_17 : f32 to vector<16x128xf32>
    %24 = arith.maximumf %22, %23 : vector<16x128xf32>
    %25 = arith.truncf %24 : vector<16x128xf32> to vector<16x128xbf16>
    %c0_18 = arith.constant 0 : index
    %c0_19 = arith.constant 0 : index
    %26 = vector.load %arg8[%c0_18, %c0_19] : memref<128x64xbf16, #tpu.memory_space<vmem>>, vector<128x64xbf16>
    %cst_20 = arith.constant dense<0.000000e+00> : vector<16x64xf32>
    %27 = tpu.matmul %25, %26, %cst_20 {dimension_numbers = #tpu.dot_dimension_numbers<[1], [0], [0], [1], [0, 0, 1, 1], [], []>} : vector<16x128xbf16>, vector<128x64xbf16>, vector<16x64xf32> -> vector<16x64xf32>
    %c0_21 = arith.constant 0 : index
    %c0_22 = arith.constant 0 : index
    %28 = vector.load %arg9[%c0_21, %c0_22] : memref<1x64xf32, #tpu.memory_space<vmem>>, vector<1x64xf32>
    %29 = vector.broadcast %28 : vector<1x64xf32> to vector<16x64xf32>
    %30 = arith.addf %27, %29 : vector<16x64xf32>
    %cst_23 = arith.constant 0.000000e+00 : f32
    %31 = vector.broadcast %cst_23 : f32 to vector<16x64xf32>
    %32 = arith.maximumf %30, %31 : vector<16x64xf32>
    %33 = arith.truncf %32 : vector<16x64xf32> to vector<16x64xbf16>
    %c0_24 = arith.constant 0 : index
    %c0_25 = arith.constant 0 : index
    %34 = vector.load %arg10[%c0_24, %c0_25] : memref<64x128xbf16, #tpu.memory_space<vmem>>, vector<64x128xbf16>
    %cst_26 = arith.constant dense<0.000000e+00> : vector<16x128xf32>
    %35 = tpu.matmul %33, %34, %cst_26 {dimension_numbers = #tpu.dot_dimension_numbers<[1], [0], [0], [1], [0, 0, 1, 1], [], []>} : vector<16x64xbf16>, vector<64x128xbf16>, vector<16x128xf32> -> vector<16x128xf32>
    %c0_27 = arith.constant 0 : index
    %c0_28 = arith.constant 0 : index
    %36 = vector.load %arg11[%c0_27, %c0_28] : memref<1x128xf32, #tpu.memory_space<vmem>>, vector<1x128xf32>
    %37 = vector.broadcast %36 : vector<1x128xf32> to vector<16x128xf32>
    %38 = arith.addf %35, %37 : vector<16x128xf32>
    %39 = arith.truncf %38 : vector<16x128xf32> to vector<16x128xbf16>
    %c0_29 = arith.constant 0 : index
    %c0_30 = arith.constant 0 : index
    %40 = vector.load %arg12[%c0_29, %c0_30] : memref<16x128xbf16, #tpu.memory_space<vmem>>, vector<16x128xbf16>
    tpu.vector_store %arg12[%c0_29, %c0_30], %39 {strides = array<i32>} : memref<16x128xbf16, #tpu.memory_space<vmem>>, vector<16x128xbf16>,
    return
  }
  func.func @transform_0(%arg0: i32) -> (i32, i32) {
    %c0_i32 = arith.constant 0 : i32
    %c0_i32_0 = arith.constant 0 : i32
    return %arg0, %c0_i32 : i32, i32
  }
  func.func @transform_1(%arg0: i32) -> (i32, i32) {
    %c0_i32 = arith.constant 0 : i32
    %c0_i32_0 = arith.constant 0 : i32
    %c0_i32_1 = arith.constant 0 : i32
    return %c0_i32, %c0_i32_0 : i32, i32
  }
  func.func @transform_2(%arg0: i32) -> (i32, i32) {
    %c0_i32 = arith.constant 0 : i32
    %c0_i32_0 = arith.constant 0 : i32
    %c0_i32_1 = arith.constant 0 : i32
    return %c0_i32, %c0_i32_0 : i32, i32
  }
  func.func @transform_3(%arg0: i32) -> (i32, i32) {
    %c0_i32 = arith.constant 0 : i32
    %c0_i32_0 = arith.constant 0 : i32
    %c0_i32_1 = arith.constant 0 : i32
    return %c0_i32, %c0_i32_0 : i32, i32
  }
  func.func @transform_4(%arg0: i32) -> (i32, i32) {
    %c0_i32 = arith.constant 0 : i32
    %c0_i32_0 = arith.constant 0 : i32
    %c0_i32_1 = arith.constant 0 : i32
    return %c0_i32, %c0_i32_0 : i32, i32
  }
  func.func @transform_5(%arg0: i32) -> (i32, i32) {
    %c0_i32 = arith.constant 0 : i32
    %c0_i32_0 = arith.constant 0 : i32
    %c0_i32_1 = arith.constant 0 : i32
    return %c0_i32, %c0_i32_0 : i32, i32
  }
  func.func @transform_6(%arg0: i32) -> (i32, i32) {
    %c0_i32 = arith.constant 0 : i32
    %c0_i32_0 = arith.constant 0 : i32
    %c0_i32_1 = arith.constant 0 : i32
    return %c0_i32, %c0_i32_0 : i32, i32
  }
  func.func @transform_7(%arg0: i32) -> (i32, i32) {
    %c0_i32 = arith.constant 0 : i32
    %c0_i32_0 = arith.constant 0 : i32
    %c0_i32_1 = arith.constant 0 : i32
    return %c0_i32, %c0_i32_0 : i32, i32
  }
  func.func @transform_8(%arg0: i32) -> (i32, i32) {
    %c0_i32 = arith.constant 0 : i32
    %c0_i32_0 = arith.constant 0 : i32
    %c0_i32_1 = arith.constant 0 : i32
    return %c0_i32, %c0_i32_0 : i32, i32
  }
  func.func @transform_9(%arg0: i32) -> (i32, i32) {
    %c0_i32 = arith.constant 0 : i32
    %c0_i32_0 = arith.constant 0 : i32
    %c0_i32_1 = arith.constant 0 : i32
    return %c0_i32, %c0_i32_0 : i32, i32
  }
  func.func @transform_10(%arg0: i32) -> (i32, i32) {
    %c0_i32 = arith.constant 0 : i32
    %c0_i32_0 = arith.constant 0 : i32
    %c0_i32_1 = arith.constant 0 : i32
    return %c0_i32, %c0_i32_0 : i32, i32
  }
  func.func @transform_11(%arg0: i32) -> (i32, i32) {
    %c0_i32 = arith.constant 0 : i32
    %c0_i32_0 = arith.constant 0 : i32
    return %arg0, %c0_i32 : i32, i32
  }
}

</mosaic_0001>

<llo_original>
// kernel: tpu_custom_call.1
$region0: #{tpu_custom_call.1}
  #allocation0 [shape = 'u32[]', space=smem, size = 0x4, offset = 0x4, fixed_abs, tag = 'smem constant byte address 0x4 - core index']
  #allocation1 [shape = 'u32[144,128]{1,0:T(1,128)}', space=vmem, size = 0x12000, scoped, tag = 'internal scratch']
  %s0 = inlined_call_operand.hbm [shape: f32[16,784], index: 0, kind: input, shape index: {}]
  %s1 = inlined_call_operand.hbm [shape: bf16[784,512], index: 1, kind: input, shape index: {}]
  %s2 = inlined_call_operand.vmem [shape: f32[1,512], index: 2, kind: input, shape index: {}]
  %s3 = inlined_call_operand.hbm [shape: bf16[512,256], index: 3, kind: input, shape index: {}]
  %s4 = inlined_call_operand.vmem [shape: f32[1,256], index: 4, kind: input, shape index: {}]
  %s5 = inlined_call_operand.hbm [shape: bf16[256,128], index: 5, kind: input, shape index: {}]
  %s6 = inlined_call_operand.vmem [shape: f32[1,128], index: 6, kind: input, shape index: {}]
  %s7 = inlined_call_operand.vmem [shape: bf16[128,64], index: 7, kind: input, shape index: {}]
  %s8 = inlined_call_operand.vmem [shape: f32[1,64], index: 8, kind: input, shape index: {}]
  %s9 = inlined_call_operand.vmem [shape: bf16[64,128], index: 9, kind: input, shape index: {}]
  %s10 = inlined_call_operand.vmem [shape: f32[1,128], index: 10, kind: input, shape index: {}]
  %s11 = inlined_call_operand.hbm [shape: bf16[16,128], index: 11, kind: output, shape index: {}]
  %s12 = sld [smem:[#allocation0]]
  $region70: #{tpu_custom_call.1} parent=0
    _
  %s14 = ssub.s32 1, %s12
  %s15 = scalar_select 0, %s14, %s12
  $region1: #{tpu_custom_call.1} parent=0
    #allocation2 [shape = 'u8[57344]{0}', space=vmem, size = 0xe000, scoped, tag = 'input window, operand 0, single buffered']
    #allocation3 [shape = 's32[1]{0}', space=sflag, size = 0x4, scoped, tag = 'scoped memory for tpu_custom_call.1']
    #allocation4 [shape = 's32[1]{0}', space=sflag, size = 0x4, scoped, tag = 'scoped memory for tpu_custom_call.1']
    #allocation5 [shape = 'u8[802816]{0}', space=vmem, size = 0xc4000, scoped, tag = 'input window, operand 1, single buffered']
    #allocation6 [shape = 's32[1]{0}', space=sflag, size = 0x4, scoped, tag = 'scoped memory for tpu_custom_call.1']
    #allocation7 [shape = 'u8[262144]{0}', space=vmem, size = 0x40000, scoped, tag = 'input window, operand 3, single buffered']
    #allocation8 [shape = 'u8[65536]{0}', space=vmem, size = 0x10000, scoped, tag = 'input window, operand 5, single buffered']
    #allocation9 [shape = 's32[1]{0}', space=sflag, size = 0x4, scoped, tag = 'scoped memory for tpu_custom_call.1']
    #allocation10 [shape = 'u8[4096]{0}', space=vmem, size = 0x1000, scoped, tag = 'output window, operand 0, single buffered']
    %16 = vsyncpa [#allocation3], 0
    %17 = vsyncpa [#allocation6], 0
    %18 = vsyncpa [#allocation9], 0
    %19 = vsyncpa [#allocation4], 0
    // Predicated region
    $region2: #{tpu_custom_call.1} parent=1 // pred_check
      _
    $region3: #{tpu_custom_call.1} parent=1 // pred_check_branch
      %21 = sbr.rel (0) target = $region5
    $region4: #{tpu_custom_call.1} parent=1 // pred_region
      %s23 = ssub.s32 1792, 1792
      %24 = vsyncadd [#allocation3], %s23
      %s25 = sshll.u32 [#allocation2], 4
      %s26 = int_to_ptr.vmem [resolvable:$true] %s25
      %31 = dma.hbm_to_vmem [thread:$0]  %s0, 1792, %s26, [#allocation3], 896, 896, 56
    $region5: #{tpu_custom_call.1} parent=1 // pred_fallthru
      _
    // Predicated region
    $region6: #{tpu_custom_call.1} parent=1 // pred_check
      _
    $region7: #{tpu_custom_call.1} parent=1 // pred_check_branch
      %33 = sbr.rel (0) target = $region9
    $region8: #{tpu_custom_call.1} parent=1 // pred_region
      %s35 = ssub.s32 25088, 25088
      %36 = vsyncadd [#allocation6], %s35
      %s37 = sshll.u32 [#allocation5], 4
      %s38 = int_to_ptr.vmem [resolvable:$true] %s37
      %43 = dma.hbm_to_vmem [thread:$0]  %s1, 25088, %s38, [#allocation6], 256, 256, 16
    $region9: #{tpu_custom_call.1} parent=1 // pred_fallthru
      _
    // Predicated region
    $region10: #{tpu_custom_call.1} parent=1 // pred_check
      _
    $region11: #{tpu_custom_call.1} parent=1 // pred_check_branch
      %45 = sbr.rel (0) target = $region13
    $region12: #{tpu_custom_call.1} parent=1 // pred_region
      _
    $region13: #{tpu_custom_call.1} parent=1 // pred_fallthru
      _
    // Predicated region
    $region14: #{tpu_custom_call.1} parent=1 // pred_check
      _
    $region15: #{tpu_custom_call.1} parent=1 // pred_check_branch
      %47 = sbr.rel (0) target = $region17
    $region16: #{tpu_custom_call.1} parent=1 // pred_region
      %s49 = ssub.s32 8192, 8192
      %50 = vsyncadd [#allocation6], %s49
      %s51 = sshll.u32 [#allocation7], 4
      %s52 = int_to_ptr.vmem [resolvable:$true] %s51
      %57 = dma.hbm_to_vmem [thread:$0]  %s3, 8192, %s52, [#allocation6], 128, 128, 8
    $region17: #{tpu_custom_call.1} parent=1 // pred_fallthru
      _
    // Predicated region
    $region18: #{tpu_custom_call.1} parent=1 // pred_check
      _
    $region19: #{tpu_custom_call.1} parent=1 // pred_check_branch
      %59 = sbr.rel (0) target = $region21
    $region20: #{tpu_custom_call.1} parent=1 // pred_region
      _
    $region21: #{tpu_custom_call.1} parent=1 // pred_fallthru
      _
    // Predicated region
    $region22: #{tpu_custom_call.1} parent=1 // pred_check
      _
    $region23: #{tpu_custom_call.1} parent=1 // pred_check_branch
      %61 = sbr.rel (0) target = $region25
    $region24: #{tpu_custom_call.1} parent=1 // pred_region
      %s63 = ssub.s32 2048, 2048
      %64 = vsyncadd [#allocation9], %s63
      %s65 = sshll.u32 [#allocation8], 4
      %s66 = int_to_ptr.vmem [resolvable:$true] %s65
      %71 = dma.hbm_to_vmem [thread:$0]  %s5, 2048, %s66, [#allocation9], 64, 64, 4
    $region25: #{tpu_custom_call.1} parent=1 // pred_fallthru
      _
    // Predicated region
    $region26: #{tpu_custom_call.1} parent=1 // pred_check
      _
    $region27: #{tpu_custom_call.1} parent=1 // pred_check_branch
      %73 = sbr.rel (0) target = $region29
    $region28: #{tpu_custom_call.1} parent=1 // pred_region
      _
    $region29: #{tpu_custom_call.1} parent=1 // pred_fallthru
      _
    // Predicated region
    $region30: #{tpu_custom_call.1} parent=1 // pred_check
      _
    $region31: #{tpu_custom_call.1} parent=1 // pred_check_branch
      %75 = sbr.rel (0) target = $region33
    $region32: #{tpu_custom_call.1} parent=1 // pred_region
      _
    $region33: #{tpu_custom_call.1} parent=1 // pred_fallthru
      _
    // Predicated region
    $region34: #{tpu_custom_call.1} parent=1 // pred_check
      _
    $region35: #{tpu_custom_call.1} parent=1 // pred_check_branch
      %77 = sbr.rel (0) target = $region37
    $region36: #{tpu_custom_call.1} parent=1 // pred_region
      _
    $region37: #{tpu_custom_call.1} parent=1 // pred_fallthru
      _
    // Predicated region
    $region38: #{tpu_custom_call.1} parent=1 // pred_check
      _
    $region39: #{tpu_custom_call.1} parent=1 // pred_check_branch
      %79 = sbr.rel (0) target = $region41
    $region40: #{tpu_custom_call.1} parent=1 // pred_region
      _
    $region41: #{tpu_custom_call.1} parent=1 // pred_fallthru
      _
    // Predicated region
    $region42: #{tpu_custom_call.1} parent=1 // pred_check
      _
    $region43: #{tpu_custom_call.1} parent=1 // pred_check_branch
      %81 = sbr.rel (0) target = $region45
    $region44: #{tpu_custom_call.1} parent=1 // pred_region
      _
    $region45: #{tpu_custom_call.1} parent=1 // pred_fallthru
      _
    // Predicated region
    $region46: #{tpu_custom_call.1} parent=1 // pred_check
      _
    $region47: #{tpu_custom_call.1} parent=1 // pred_check_branch
      %83 = sbr.rel (0) target = $region49
    $region48: #{tpu_custom_call.1} parent=1 // pred_region
      %84 = dma.done [#allocation3], 1792
    $region49: #{tpu_custom_call.1} parent=1 // pred_fallthru
      _
    // Predicated region
    $region50: #{tpu_custom_call.1} parent=1 // pred_check
      _
    $region51: #{tpu_custom_call.1} parent=1 // pred_check_branch
      %86 = sbr.rel (0) target = $region53
    $region52: #{tpu_custom_call.1} parent=1 // pred_region
      %87 = dma.done [#allocation6], 25088
    $region53: #{tpu_custom_call.1} parent=1 // pred_fallthru
      _
    // Predicated region
    $region54: #{tpu_custom_call.1} parent=1 // pred_check
      _
    $region55: #{tpu_custom_call.1} parent=1 // pred_check_branch
      %89 = sbr.rel (0) target = $region57
    $region56: #{tpu_custom_call.1} parent=1 // pred_region
      %90 = dma.done [#allocation6], 8192
    $region57: #{tpu_custom_call.1} parent=1 // pred_fallthru
      _
    // Predicated region
    $region58: #{tpu_custom_call.1} parent=1 // pred_check
      _
    $region59: #{tpu_custom_call.1} parent=1 // pred_check_branch
      %92 = sbr.rel (0) target = $region61
    $region60: #{tpu_custom_call.1} parent=1 // pred_region
      %93 = dma.done [#allocation9], 2048
    $region61: #{tpu_custom_call.1} parent=1 // pred_fallthru
      _
    %v95 = vld [vmem:[#allocation2] sm:$0xff]
    %v96 = vld [vmem:[#allocation2 + $0x8] sm:$0xff]
    %v97 = vld [vmem:[#allocation2 + $0x10] sm:$0xff]
    %v98 = vld [vmem:[#allocation2 + $0x18] sm:$0xff]
    %v99 = vld [vmem:[#allocation2 + $0x20] sm:$0xff]
    %v100 = vld [vmem:[#allocation2 + $0x28] sm:$0xff]
    %v101 = vld [vmem:[#allocation2 + $0x30] sm:$0xff]
    %v102 = vld [vmem:[#allocation2 + $0x38] sm:$0xff]
    %v103 = vld [vmem:[#allocation2 + $0x40] sm:$0xff]
    %v104 = vld [vmem:[#allocation2 + $0x48] sm:$0xff]
    %v105 = vld [vmem:[#allocation2 + $0x50] sm:$0xff]
    %v106 = vld [vmem:[#allocation2 + $0x58] sm:$0xff]
    %v107 = vld [vmem:[#allocation2 + $0x60] sm:$0xff]
    %v108 = vld [vmem:[#allocation2 + $0x68] sm:$0xff]
    %v109 = vpack.c.bf16 %v102, %v95
    %v110 = vpack.c.bf16 %v103, %v96
    %v111 = vpack.c.bf16 %v104, %v97
    %v112 = vpack.c.bf16 %v105, %v98
    %v113 = vpack.c.bf16 %v106, %v99
    %v114 = vpack.c.bf16 %v107, %v100
    %v115 = vpack.c.bf16 %v108, %v101
    %v116 = vld [vmem:[#allocation5] sm:$0xff]
    %v117 = vld [vmem:[#allocation5 + $0x8] sm:$0xff]
    %v118 = vld [vmem:[#allocation5 + $0x10] sm:$0xff]
    %v119 = vld [vmem:[#allocation5 + $0x18] sm:$0xff]
    %v120 = vld [vmem:[#allocation5 + $0x20] sm:$0xff]
    %v121 = vld [vmem:[#allocation5 + $0x28] sm:$0xff]
    %v122 = vld [vmem:[#allocation5 + $0x30] sm:$0xff]
    %v123 = vld [vmem:[#allocation5 + $0x38] sm:$0xff]
    %v124 = vld [vmem:[#allocation5 + $0x40] sm:$0xff]
    %v125 = vld [vmem:[#allocation5 + $0x48] sm:$0xff]
    %v126 = vld [vmem:[#allocation5 + $0x50] sm:$0xff]
    %v127 = vld [vmem:[#allocation5 + $0x58] sm:$0xff]
    %v128 = vld [vmem:[#allocation5 + $0x60] sm:$0xff]
    %v129 = vld [vmem:[#allocation5 + $0x68] sm:$0xff]
    %v130 = vld [vmem:[#allocation5 + $0x70] sm:$0xff]
    %v131 = vld [vmem:[#allocation5 + $0x78] sm:$0xff]
    %v132 = vld [vmem:[#allocation5 + $0x80] sm:$0xff]
    %v133 = vld [vmem:[#allocation5 + $0x88] sm:$0xff]
    %v134 = vld [vmem:[#allocation5 + $0x90] sm:$0xff]
    %v135 = vld [vmem:[#allocation5 + $0x98] sm:$0xff]
    %v136 = vld [vmem:[#allocation5 + $0xa0] sm:$0xff]
    %v137 = vld [vmem:[#allocation5 + $0xa8] sm:$0xff]
    %v138 = vld [vmem:[#allocation5 + $0xb0] sm:$0xff]
    %v139 = vld [vmem:[#allocation5 + $0xb8] sm:$0xff]
    %v140 = vld [vmem:[#allocation5 + $0xc0] sm:$0xff]
    %v141 = vld [vmem:[#allocation5 + $0xc8] sm:$0xff]
    %v142 = vld [vmem:[#allocation5 + $0xd0] sm:$0xff]
    %v143 = vld [vmem:[#allocation5 + $0xd8] sm:$0xff]
    %v144 = vld [vmem:[#allocation5 + $0xe0] sm:$0xff]
    %v145 = vld [vmem:[#allocation5 + $0xe8] sm:$0xff]
    %v146 = vld [vmem:[#allocation5 + $0xf0] sm:$0xff]
    %v147 = vld [vmem:[#allocation5 + $0xf8] sm:$0xff]
    %v148 = vld [vmem:[#allocation5 + $0x100] sm:$0xff]
    %v149 = vld [vmem:[#allocation5 + $0x108] sm:$0xff]
    %v150 = vld [vmem:[#allocation5 + $0x110] sm:$0xff]
    %v151 = vld [vmem:[#allocation5 + $0x118] sm:$0xff]
    %v152 = vld [vmem:[#allocation5 + $0x120] sm:$0xff]
    %v153 = vld [vmem:[#allocation5 + $0x128] sm:$0xff]
    %v154 = vld [vmem:[#allocation5 + $0x130] sm:$0xff]
    %v155 = vld [vmem:[#allocation5 + $0x138] sm:$0xff]
    %v156 = vld [vmem:[#allocation5 + $0x140] sm:$0xff]
    %v157 = vld [vmem:[#allocation5 + $0x148] sm:$0xff]
    %v158 = vld [vmem:[#allocation5 + $0x150] sm:$0xff]
    %v159 = vld [vmem:[#allocation5 + $0x158] sm:$0xff]
    %v160 = vld [vmem:[#allocation5 + $0x160] sm:$0xff]
    %v161 = vld [vmem:[#allocation5 + $0x168] sm:$0xff]
    %v162 = vld [vmem:[#allocation5 + $0x170] sm:$0xff]
    %v163 = vld [vmem:[#allocation5 + $0x178] sm:$0xff]
    %v164 = vld [vmem:[#allocation5 + $0x180] sm:$0xff]
    %v165 = vld [vmem:[#allocation5 + $0x188] sm:$0xff]
    %v166 = vld [vmem:[#allocation5 + $0x190] sm:$0xff]
    %v167 = vld [vmem:[#allocation5 + $0x198] sm:$0xff]
    %v168 = vld [vmem:[#allocation5 + $0x1a0] sm:$0xff]
    %v169 = vld [vmem:[#allocation5 + $0x1a8] sm:$0xff]
    %v170 = vld [vmem:[#allocation5 + $0x1b0] sm:$0xff]
    %v171 = vld [vmem:[#allocation5 + $0x1b8] sm:$0xff]
    %v172 = vld [vmem:[#allocation5 + $0x1c0] sm:$0xff]
    %v173 = vld [vmem:[#allocation5 + $0x1c8] sm:$0xff]
    %v174 = vld [vmem:[#allocation5 + $0x1d0] sm:$0xff]
    %v175 = vld [vmem:[#allocation5 + $0x1d8] sm:$0xff]
    %v176 = vld [vmem:[#allocation5 + $0x1e0] sm:$0xff]
    %v177 = vld [vmem:[#allocation5 + $0x1e8] sm:$0xff]
    %v178 = vld [vmem:[#allocation5 + $0x1f0] sm:$0xff]
    %v179 = vld [vmem:[#allocation5 + $0x1f8] sm:$0xff]
    %v180 = vld [vmem:[#allocation5 + $0x200] sm:$0xff]
    %v181 = vld [vmem:[#allocation5 + $0x208] sm:$0xff]
    %v182 = vld [vmem:[#allocation5 + $0x210] sm:$0xff]
    %v183 = vld [vmem:[#allocation5 + $0x218] sm:$0xff]
    %v184 = vld [vmem:[#allocation5 + $0x220] sm:$0xff]
    %v185 = vld [vmem:[#allocation5 + $0x228] sm:$0xff]
    %v186 = vld [vmem:[#allocation5 + $0x230] sm:$0xff]
    %v187 = vld [vmem:[#allocation5 + $0x238] sm:$0xff]
    %v188 = vld [vmem:[#allocation5 + $0x240] sm:$0xff]
    %v189 = vld [vmem:[#allocation5 + $0x248] sm:$0xff]
    %v190 = vld [vmem:[#allocation5 + $0x250] sm:$0xff]
    %v191 = vld [vmem:[#allocation5 + $0x258] sm:$0xff]
    %v192 = vld [vmem:[#allocation5 + $0x260] sm:$0xff]
    %v193 = vld [vmem:[#allocation5 + $0x268] sm:$0xff]
    %v194 = vld [vmem:[#allocation5 + $0x270] sm:$0xff]
    %v195 = vld [vmem:[#allocation5 + $0x278] sm:$0xff]
    %v196 = vld [vmem:[#allocation5 + $0x280] sm:$0xff]
    %v197 = vld [vmem:[#allocation5 + $0x288] sm:$0xff]
    %v198 = vld [vmem:[#allocation5 + $0x290] sm:$0xff]
    %v199 = vld [vmem:[#allocation5 + $0x298] sm:$0xff]
    %v200 = vld [vmem:[#allocation5 + $0x2a0] sm:$0xff]
    %v201 = vld [vmem:[#allocation5 + $0x2a8] sm:$0xff]
    %v202 = vld [vmem:[#allocation5 + $0x2b0] sm:$0xff]
    %v203 = vld [vmem:[#allocation5 + $0x2b8] sm:$0xff]
    %v204 = vld [vmem:[#allocation5 + $0x2c0] sm:$0xff]
    %v205 = vld [vmem:[#allocation5 + $0x2c8] sm:$0xff]
    %v206 = vld [vmem:[#allocation5 + $0x2d0] sm:$0xff]
    %v207 = vld [vmem:[#allocation5 + $0x2d8] sm:$0xff]
    %v208 = vld [vmem:[#allocation5 + $0x2e0] sm:$0xff]
    %v209 = vld [vmem:[#allocation5 + $0x2e8] sm:$0xff]
    %v210 = vld [vmem:[#allocation5 + $0x2f0] sm:$0xff]
    %v211 = vld [vmem:[#allocation5 + $0x2f8] sm:$0xff]
    %v212 = vld [vmem:[#allocation5 + $0x300] sm:$0xff]
    %v213 = vld [vmem:[#allocation5 + $0x308] sm:$0xff]
    %v214 = vld [vmem:[#allocation5 + $0x310] sm:$0xff]
    %v215 = vld [vmem:[#allocation5 + $0x318] sm:$0xff]
    %v216 = vld [vmem:[#allocation5 + $0x320] sm:$0xff]
    %v217 = vld [vmem:[#allocation5 + $0x328] sm:$0xff]
    %v218 = vld [vmem:[#allocation5 + $0x330] sm:$0xff]
    %v219 = vld [vmem:[#allocation5 + $0x338] sm:$0xff]
    %v220 = vld [vmem:[#allocation5 + $0x340] sm:$0xff]
    %v221 = vld [vmem:[#allocation5 + $0x348] sm:$0xff]
    %v222 = vld [vmem:[#allocation5 + $0x350] sm:$0xff]
    %v223 = vld [vmem:[#allocation5 + $0x358] sm:$0xff]
    %v224 = vld [vmem:[#allocation5 + $0x360] sm:$0xff]
    %v225 = vld [vmem:[#allocation5 + $0x368] sm:$0xff]
    %v226 = vld [vmem:[#allocation5 + $0x370] sm:$0xff]
    %v227 = vld [vmem:[#allocation5 + $0x378] sm:$0xff]
    %v228 = vld [vmem:[#allocation5 + $0x380] sm:$0xff]
    %v229 = vld [vmem:[#allocation5 + $0x388] sm:$0xff]
    %v230 = vld [vmem:[#allocation5 + $0x390] sm:$0xff]
    %v231 = vld [vmem:[#allocation5 + $0x398] sm:$0xff]
    %v232 = vld [vmem:[#allocation5 + $0x3a0] sm:$0xff]
    %v233 = vld [vmem:[#allocation5 + $0x3a8] sm:$0xff]
    %v234 = vld [vmem:[#allocation5 + $0x3b0] sm:$0xff]
    %v235 = vld [vmem:[#allocation5 + $0x3b8] sm:$0xff]
    %v236 = vld [vmem:[#allocation5 + $0x3c0] sm:$0xff]
    %v237 = vld [vmem:[#allocation5 + $0x3c8] sm:$0xff]
    %v238 = vld [vmem:[#allocation5 + $0x3d0] sm:$0xff]
    %v239 = vld [vmem:[#allocation5 + $0x3d8] sm:$0xff]
    %v240 = vld [vmem:[#allocation5 + $0x3e0] sm:$0xff]
    %v241 = vld [vmem:[#allocation5 + $0x3e8] sm:$0xff]
    %v242 = vld [vmem:[#allocation5 + $0x3f0] sm:$0xff]
    %v243 = vld [vmem:[#allocation5 + $0x3f8] sm:$0xff]
    %v244 = vld [vmem:[#allocation5 + $0x400] sm:$0xff]
    %v245 = vld [vmem:[#allocation5 + $0x408] sm:$0xff]
    %v246 = vld [vmem:[#allocation5 + $0x410] sm:$0xff]
    %v247 = vld [vmem:[#allocation5 + $0x418] sm:$0xff]
    %v248 = vld [vmem:[#allocation5 + $0x420] sm:$0xff]
    %v249 = vld [vmem:[#allocation5 + $0x428] sm:$0xff]
    %v250 = vld [vmem:[#allocation5 + $0x430] sm:$0xff]
    %v251 = vld [vmem:[#allocation5 + $0x438] sm:$0xff]
    %v252 = vld [vmem:[#allocation5 + $0x440] sm:$0xff]
    %v253 = vld [vmem:[#allocation5 + $0x448] sm:$0xff]
    %v254 = vld [vmem:[#allocation5 + $0x450] sm:$0xff]
    %v255 = vld [vmem:[#allocation5 + $0x458] sm:$0xff]
    %v256 = vld [vmem:[#allocation5 + $0x460] sm:$0xff]
    %v257 = vld [vmem:[#allocation5 + $0x468] sm:$0xff]
    %v258 = vld [vmem:[#allocation5 + $0x470] sm:$0xff]
    %v259 = vld [vmem:[#allocation5 + $0x478] sm:$0xff]
    %v260 = vld [vmem:[#allocation5 + $0x480] sm:$0xff]
    %v261 = vld [vmem:[#allocation5 + $0x488] sm:$0xff]
    %v262 = vld [vmem:[#allocation5 + $0x490] sm:$0xff]
    %v263 = vld [vmem:[#allocation5 + $0x498] sm:$0xff]
    %v264 = vld [vmem:[#allocation5 + $0x4a0] sm:$0xff]
    %v265 = vld [vmem:[#allocation5 + $0x4a8] sm:$0xff]
    %v266 = vld [vmem:[#allocation5 + $0x4b0] sm:$0xff]
    %v267 = vld [vmem:[#allocation5 + $0x4b8] sm:$0xff]
    %v268 = vld [vmem:[#allocation5 + $0x4c0] sm:$0xff]
    %v269 = vld [vmem:[#allocation5 + $0x4c8] sm:$0xff]
    %v270 = vld [vmem:[#allocation5 + $0x4d0] sm:$0xff]
    %v271 = vld [vmem:[#allocation5 + $0x4d8] sm:$0xff]
    %v272 = vld [vmem:[#allocation5 + $0x4e0] sm:$0xff]
    %v273 = vld [vmem:[#allocation5 + $0x4e8] sm:$0xff]
    %v274 = vld [vmem:[#allocation5 + $0x4f0] sm:$0xff]
    %v275 = vld [vmem:[#allocation5 + $0x4f8] sm:$0xff]
    %v276 = vld [vmem:[#allocation5 + $0x500] sm:$0xff]
    %v277 = vld [vmem:[#allocation5 + $0x508] sm:$0xff]
    %v278 = vld [vmem:[#allocation5 + $0x510] sm:$0xff]
    %v279 = vld [vmem:[#allocation5 + $0x518] sm:$0xff]
    %v280 = vld [vmem:[#allocation5 + $0x520] sm:$0xff]
    %v281 = vld [vmem:[#allocation5 + $0x528] sm:$0xff]
    %v282 = vld [vmem:[#allocation5 + $0x530] sm:$0xff]
    %v283 = vld [vmem:[#allocation5 + $0x538] sm:$0xff]
    %v284 = vld [vmem:[#allocation5 + $0x540] sm:$0xff]
    %v285 = vld [vmem:[#allocation5 + $0x548] sm:$0xff]
    %v286 = vld [vmem:[#allocation5 + $0x550] sm:$0xff]
    %v287 = vld [vmem:[#allocation5 + $0x558] sm:$0xff]
    %v288 = vld [vmem:[#allocation5 + $0x560] sm:$0xff]
    %v289 = vld [vmem:[#allocation5 + $0x568] sm:$0xff]
    %v290 = vld [vmem:[#allocation5 + $0x570] sm:$0xff]
    %v291 = vld [vmem:[#allocation5 + $0x578] sm:$0xff]
    %v292 = vld [vmem:[#allocation5 + $0x580] sm:$0xff]
    %v293 = vld [vmem:[#allocation5 + $0x588] sm:$0xff]
    %v294 = vld [vmem:[#allocation5 + $0x590] sm:$0xff]
    %v295 = vld [vmem:[#allocation5 + $0x598] sm:$0xff]
    %v296 = vld [vmem:[#allocation5 + $0x5a0] sm:$0xff]
    %v297 = vld [vmem:[#allocation5 + $0x5a8] sm:$0xff]
    %v298 = vld [vmem:[#allocation5 + $0x5b0] sm:$0xff]
    %v299 = vld [vmem:[#allocation5 + $0x5b8] sm:$0xff]
    %v300 = vld [vmem:[#allocation5 + $0x5c0] sm:$0xff]
    %v301 = vld [vmem:[#allocation5 + $0x5c8] sm:$0xff]
    %v302 = vld [vmem:[#allocation5 + $0x5d0] sm:$0xff]
    %v303 = vld [vmem:[#allocation5 + $0x5d8] sm:$0xff]
    %v304 = vld [vmem:[#allocation5 + $0x5e0] sm:$0xff]
    %v305 = vld [vmem:[#allocation5 + $0x5e8] sm:$0xff]
    %v306 = vld [vmem:[#allocation5 + $0x5f0] sm:$0xff]
    %v307 = vld [vmem:[#allocation5 + $0x5f8] sm:$0xff]
    %v308 = vld [vmem:[#allocation5 + $0x600] sm:$0xff]
    %v309 = vld [vmem:[#allocation5 + $0x608] sm:$0xff]
    %v310 = vld [vmem:[#allocation5 + $0x610] sm:$0xff]
    %v311 = vld [vmem:[#allocation5 + $0x618] sm:$0xff]
    %v312 = vld [vmem:[%s2] sm:$0xf]
    %v314 = vlaneseq
    %v315 = vshrl.u32 %v314, 7
    %v316 = vsub.s32 0, %v315
    %v317 = vrot.slane %v312, %v316
    %v318 = vlaneseq
    %v319 = vshrl.u32 %v318, 7
    %v320 = vsub.s32 1, %v319
    %v321 = vrot.slane %v312, %v320
    %v322 = vlaneseq
    %v323 = vshrl.u32 %v322, 7
    %v324 = vsub.s32 2, %v323
    %v325 = vrot.slane %v312, %v324
    %v326 = vlaneseq
    %v327 = vshrl.u32 %v326, 7
    %v328 = vsub.s32 3, %v327
    %v329 = vrot.slane %v312, %v328
    %v530 = vunpack.c.l.b16 %v116
    %v531 = vunpack.c.h.b16 %v116
    %v532 = vunpack.c.l.b16 %v117
    %v533 = vunpack.c.h.b16 %v117
    %v534 = vunpack.c.l.b16 %v118
    %v535 = vunpack.c.h.b16 %v118
    %v536 = vunpack.c.l.b16 %v119
    %v537 = vunpack.c.h.b16 %v119
    %v538 = vunpack.c.l.b16 %v120
    %v539 = vunpack.c.h.b16 %v120
    %v540 = vunpack.c.l.b16 %v121
    %v541 = vunpack.c.h.b16 %v121
    %v542 = vunpack.c.l.b16 %v122
    %v543 = vunpack.c.h.b16 %v122
    %v544 = vunpack.c.l.b16 %v123
    %v545 = vunpack.c.h.b16 %v123
    %v546 = vunpack.c.l.b16 %v124
    %v547 = vunpack.c.h.b16 %v124
    %v548 = vunpack.c.l.b16 %v125
    %v549 = vunpack.c.h.b16 %v125
    %v550 = vunpack.c.l.b16 %v126
    %v551 = vunpack.c.h.b16 %v126
    %v552 = vunpack.c.l.b16 %v127
    %v553 = vunpack.c.h.b16 %v127
    %v554 = vunpack.c.l.b16 %v128
    %v555 = vunpack.c.h.b16 %v128
    %v556 = vunpack.c.l.b16 %v129
    %v557 = vunpack.c.h.b16 %v129
    %v558 = vunpack.c.l.b16 %v130
    %v559 = vunpack.c.h.b16 %v130
    %v560 = vunpack.c.l.b16 %v131
    %v561 = vunpack.c.h.b16 %v131
    %v562 = vunpack.c.l.b16 %v132
    %v563 = vunpack.c.h.b16 %v132
    %v564 = vunpack.c.l.b16 %v133
    %v565 = vunpack.c.h.b16 %v133
    %v566 = vunpack.c.l.b16 %v134
    %v567 = vunpack.c.h.b16 %v134
    %v568 = vunpack.c.l.b16 %v135
    %v569 = vunpack.c.h.b16 %v135
    %v570 = vunpack.c.l.b16 %v136
    %v571 = vunpack.c.h.b16 %v136
    %v572 = vunpack.c.l.b16 %v137
    %v573 = vunpack.c.h.b16 %v137
    %v574 = vunpack.c.l.b16 %v138
    %v575 = vunpack.c.h.b16 %v138
    %v576 = vunpack.c.l.b16 %v139
    %v577 = vunpack.c.h.b16 %v139
    %v578 = vunpack.c.l.b16 %v140
    %v579 = vunpack.c.h.b16 %v140
    %v580 = vunpack.c.l.b16 %v141
    %v581 = vunpack.c.h.b16 %v141
    %v582 = vunpack.c.l.b16 %v142
    %v583 = vunpack.c.h.b16 %v142
    %v584 = vunpack.c.l.b16 %v143
    %v585 = vunpack.c.h.b16 %v143
    %v586 = vunpack.c.l.b16 %v144
    %v587 = vunpack.c.h.b16 %v144
    %v588 = vunpack.c.l.b16 %v145
    %v589 = vunpack.c.h.b16 %v145
    %v590 = vunpack.c.l.b16 %v146
    %v591 = vunpack.c.h.b16 %v146
    %v592 = vunpack.c.l.b16 %v147
    %v593 = vunpack.c.h.b16 %v147
    %v594 = vunpack.c.l.b16 %v148
    %v595 = vunpack.c.h.b16 %v148
    %v596 = vunpack.c.l.b16 %v149
    %v597 = vunpack.c.h.b16 %v149
    %v598 = vunpack.c.l.b16 %v150
    %v599 = vunpack.c.h.b16 %v150
    %v600 = vunpack.c.l.b16 %v151
    %v601 = vunpack.c.h.b16 %v151
    %v602 = vunpack.c.l.b16 %v152
    %v603 = vunpack.c.h.b16 %v152
    %v604 = vunpack.c.l.b16 %v153
    %v605 = vunpack.c.h.b16 %v153
    %v606 = vunpack.c.l.b16 %v154
    %v607 = vunpack.c.h.b16 %v154
    %v608 = vunpack.c.l.b16 %v155
    %v609 = vunpack.c.h.b16 %v155
    %v610 = vunpack.c.l.b16 %v156
    %v611 = vunpack.c.h.b16 %v156
    %v612 = vunpack.c.l.b16 %v157
    %v613 = vunpack.c.h.b16 %v157
    %v614 = vunpack.c.l.b16 %v158
    %v615 = vunpack.c.h.b16 %v158
    %v616 = vunpack.c.l.b16 %v159
    %v617 = vunpack.c.h.b16 %v159
    %v618 = vunpack.c.l.b16 %v160
    %v619 = vunpack.c.h.b16 %v160
    %v620 = vunpack.c.l.b16 %v161
    %v621 = vunpack.c.h.b16 %v161
    %v622 = vunpack.c.l.b16 %v162
    %v623 = vunpack.c.h.b16 %v162
    %v624 = vunpack.c.l.b16 %v163
    %v625 = vunpack.c.h.b16 %v163
    %v626 = vunpack.c.l.b16 %v164
    %v627 = vunpack.c.h.b16 %v164
    %v628 = vunpack.c.l.b16 %v165
    %v629 = vunpack.c.h.b16 %v165
    %v630 = vunpack.c.l.b16 %v166
    %v631 = vunpack.c.h.b16 %v166
    %v632 = vunpack.c.l.b16 %v167
    %v633 = vunpack.c.h.b16 %v167
    %v634 = vunpack.c.l.b16 %v168
    %v635 = vunpack.c.h.b16 %v168
    %v636 = vunpack.c.l.b16 %v169
    %v637 = vunpack.c.h.b16 %v169
    %v638 = vunpack.c.l.b16 %v170
    %v639 = vunpack.c.h.b16 %v170
    %v640 = vunpack.c.l.b16 %v171
    %v641 = vunpack.c.h.b16 %v171
    %v642 = vunpack.c.l.b16 %v172
    %v643 = vunpack.c.h.b16 %v172
    %v644 = vunpack.c.l.b16 %v173
    %v645 = vunpack.c.h.b16 %v173
    %v646 = vunpack.c.l.b16 %v174
    %v647 = vunpack.c.h.b16 %v174
    %v648 = vunpack.c.l.b16 %v175
    %v649 = vunpack.c.h.b16 %v175
    %v650 = vunpack.c.l.b16 %v176
    %v651 = vunpack.c.h.b16 %v176
    %v652 = vunpack.c.l.b16 %v177
    %v653 = vunpack.c.h.b16 %v177
    %v654 = vunpack.c.l.b16 %v178
    %v655 = vunpack.c.h.b16 %v178
    %v656 = vunpack.c.l.b16 %v179
    %v657 = vunpack.c.h.b16 %v179
    %v658 = vunpack.c.l.b16 %v180
    %v659 = vunpack.c.h.b16 %v180
    %v660 = vunpack.c.l.b16 %v181
    %v661 = vunpack.c.h.b16 %v181
    %v662 = vunpack.c.l.b16 %v182
    %v663 = vunpack.c.h.b16 %v182
    %v664 = vunpack.c.l.b16 %v183
    %v665 = vunpack.c.h.b16 %v183
    %v666 = vunpack.c.l.b16 %v184
    %v667 = vunpack.c.h.b16 %v184
    %v668 = vunpack.c.l.b16 %v185
    %v669 = vunpack.c.h.b16 %v185
    %v670 = vunpack.c.l.b16 %v186
    %v671 = vunpack.c.h.b16 %v186
    %v672 = vunpack.c.l.b16 %v187
    %v673 = vunpack.c.h.b16 %v187
    %v674 = vunpack.c.l.b16 %v188
    %v675 = vunpack.c.h.b16 %v188
    %v676 = vunpack.c.l.b16 %v189
    %v677 = vunpack.c.h.b16 %v189
    %v678 = vunpack.c.l.b16 %v190
    %v679 = vunpack.c.h.b16 %v190
    %v680 = vunpack.c.l.b16 %v191
    %v681 = vunpack.c.h.b16 %v191
    %v682 = vunpack.c.l.b16 %v192
    %v683 = vunpack.c.h.b16 %v192
    %v684 = vunpack.c.l.b16 %v193
    %v685 = vunpack.c.h.b16 %v193
    %v686 = vunpack.c.l.b16 %v194
    %v687 = vunpack.c.h.b16 %v194
    %v688 = vunpack.c.l.b16 %v195
    %v689 = vunpack.c.h.b16 %v195
    %v690 = vunpack.c.l.b16 %v196
    %v691 = vunpack.c.h.b16 %v196
    %v692 = vunpack.c.l.b16 %v197
    %v693 = vunpack.c.h.b16 %v197
    %v694 = vunpack.c.l.b16 %v198
    %v695 = vunpack.c.h.b16 %v198
    %v696 = vunpack.c.l.b16 %v199
    %v697 = vunpack.c.h.b16 %v199
    %v698 = vunpack.c.l.b16 %v200
    %v699 = vunpack.c.h.b16 %v200
    %v700 = vunpack.c.l.b16 %v201
    %v701 = vunpack.c.h.b16 %v201
    %v702 = vunpack.c.l.b16 %v202
    %v703 = vunpack.c.h.b16 %v202
    %v704 = vunpack.c.l.b16 %v203
    %v705 = vunpack.c.h.b16 %v203
    %v706 = vunpack.c.l.b16 %v204
    %v707 = vunpack.c.h.b16 %v204
    %v708 = vunpack.c.l.b16 %v205
    %v709 = vunpack.c.h.b16 %v205
    %v710 = vunpack.c.l.b16 %v206
    %v711 = vunpack.c.h.b16 %v206
    %v712 = vunpack.c.l.b16 %v207
    %v713 = vunpack.c.h.b16 %v207
    %v714 = vunpack.c.l.b16 %v208
    %v715 = vunpack.c.h.b16 %v208
    %v716 = vunpack.c.l.b16 %v209
    %v717 = vunpack.c.h.b16 %v209
    %v718 = vunpack.c.l.b16 %v210
    %v719 = vunpack.c.h.b16 %v210
    %v720 = vunpack.c.l.b16 %v211
    %v721 = vunpack.c.h.b16 %v211
    %v722 = vunpack.c.l.b16 %v212
    %v723 = vunpack.c.h.b16 %v212
    %v724 = vunpack.c.l.b16 %v213
    %v725 = vunpack.c.h.b16 %v213
    %v726 = vunpack.c.l.b16 %v214
    %v727 = vunpack.c.h.b16 %v214
    %v728 = vunpack.c.l.b16 %v215
    %v729 = vunpack.c.h.b16 %v215
    %v730 = vunpack.c.l.b16 %v216
    %v731 = vunpack.c.h.b16 %v216
    %v732 = vunpack.c.l.b16 %v217
    %v733 = vunpack.c.h.b16 %v217
    %v734 = vunpack.c.l.b16 %v218
    %v735 = vunpack.c.h.b16 %v218
    %v736 = vunpack.c.l.b16 %v219
    %v737 = vunpack.c.h.b16 %v219
    %v738 = vunpack.c.l.b16 %v220
    %v739 = vunpack.c.h.b16 %v220
    %v740 = vunpack.c.l.b16 %v221
    %v741 = vunpack.c.h.b16 %v221
    %v742 = vunpack.c.l.b16 %v222
    %v743 = vunpack.c.h.b16 %v222
    %v744 = vunpack.c.l.b16 %v223
    %v745 = vunpack.c.h.b16 %v223
    %v746 = vunpack.c.l.b16 %v224
    %v747 = vunpack.c.h.b16 %v224
    %v748 = vunpack.c.l.b16 %v225
    %v749 = vunpack.c.h.b16 %v225
    %v750 = vunpack.c.l.b16 %v226
    %v751 = vunpack.c.h.b16 %v226
    %v752 = vunpack.c.l.b16 %v227
    %v753 = vunpack.c.h.b16 %v227
    %v754 = vunpack.c.l.b16 %v228
    %v755 = vunpack.c.h.b16 %v228
    %v756 = vunpack.c.l.b16 %v229
    %v757 = vunpack.c.h.b16 %v229
    %v758 = vunpack.c.l.b16 %v230
    %v759 = vunpack.c.h.b16 %v230
    %v760 = vunpack.c.l.b16 %v231
    %v761 = vunpack.c.h.b16 %v231
    %v762 = vunpack.c.l.b16 %v232
    %v763 = vunpack.c.h.b16 %v232
    %v764 = vunpack.c.l.b16 %v233
    %v765 = vunpack.c.h.b16 %v233
    %v766 = vunpack.c.l.b16 %v234
    %v767 = vunpack.c.h.b16 %v234
    %v768 = vunpack.c.l.b16 %v235
    %v769 = vunpack.c.h.b16 %v235
    %v770 = vunpack.c.l.b16 %v236
    %v771 = vunpack.c.h.b16 %v236
    %v772 = vunpack.c.l.b16 %v237
    %v773 = vunpack.c.h.b16 %v237
    %v774 = vunpack.c.l.b16 %v238
    %v775 = vunpack.c.h.b16 %v238
    %v776 = vunpack.c.l.b16 %v239
    %v777 = vunpack.c.h.b16 %v239
    %v778 = vunpack.c.l.b16 %v240
    %v779 = vunpack.c.h.b16 %v240
    %v780 = vunpack.c.l.b16 %v241
    %v781 = vunpack.c.h.b16 %v241
    %v782 = vunpack.c.l.b16 %v242
    %v783 = vunpack.c.h.b16 %v242
    %v784 = vunpack.c.l.b16 %v243
    %v785 = vunpack.c.h.b16 %v243
    %v786 = vunpack.c.l.b16 %v244
    %v787 = vunpack.c.h.b16 %v244
    %v788 = vunpack.c.l.b16 %v245
    %v789 = vunpack.c.h.b16 %v245
    %v790 = vunpack.c.l.b16 %v246
    %v791 = vunpack.c.h.b16 %v246
    %v792 = vunpack.c.l.b16 %v247
    %v793 = vunpack.c.h.b16 %v247
    %v794 = vunpack.c.l.b16 %v248
    %v795 = vunpack.c.h.b16 %v248
    %v796 = vunpack.c.l.b16 %v249
    %v797 = vunpack.c.h.b16 %v249
    %v798 = vunpack.c.l.b16 %v250
    %v799 = vunpack.c.h.b16 %v250
    %v800 = vunpack.c.l.b16 %v251
    %v801 = vunpack.c.h.b16 %v251
    %v802 = vunpack.c.l.b16 %v252
    %v803 = vunpack.c.h.b16 %v252
    %v804 = vunpack.c.l.b16 %v253
    %v805 = vunpack.c.h.b16 %v253
    %v806 = vunpack.c.l.b16 %v254
    %v807 = vunpack.c.h.b16 %v254
    %v808 = vunpack.c.l.b16 %v255
    %v809 = vunpack.c.h.b16 %v255
    %v810 = vunpack.c.l.b16 %v256
    %v811 = vunpack.c.h.b16 %v256
    %v812 = vunpack.c.l.b16 %v257
    %v813 = vunpack.c.h.b16 %v257
    %v814 = vunpack.c.l.b16 %v258
    %v815 = vunpack.c.h.b16 %v258
    %v816 = vunpack.c.l.b16 %v259
    %v817 = vunpack.c.h.b16 %v259
    %v818 = vunpack.c.l.b16 %v260
    %v819 = vunpack.c.h.b16 %v260
    %v820 = vunpack.c.l.b16 %v261
    %v821 = vunpack.c.h.b16 %v261
    %v822 = vunpack.c.l.b16 %v262
    %v823 = vunpack.c.h.b16 %v262
    %v824 = vunpack.c.l.b16 %v263
    %v825 = vunpack.c.h.b16 %v263
    %v826 = vunpack.c.l.b16 %v264
    %v827 = vunpack.c.h.b16 %v264
    %v828 = vunpack.c.l.b16 %v265
    %v829 = vunpack.c.h.b16 %v265
    %v830 = vunpack.c.l.b16 %v266
    %v831 = vunpack.c.h.b16 %v266
    %v832 = vunpack.c.l.b16 %v267
    %v833 = vunpack.c.h.b16 %v267
    %v834 = vunpack.c.l.b16 %v268
    %v835 = vunpack.c.h.b16 %v268
    %v836 = vunpack.c.l.b16 %v269
    %v837 = vunpack.c.h.b16 %v269
    %v838 = vunpack.c.l.b16 %v270
    %v839 = vunpack.c.h.b16 %v270
    %v840 = vunpack.c.l.b16 %v271
    %v841 = vunpack.c.h.b16 %v271
    %v842 = vunpack.c.l.b16 %v272
    %v843 = vunpack.c.h.b16 %v272
    %v844 = vunpack.c.l.b16 %v273
    %v845 = vunpack.c.h.b16 %v273
    %v846 = vunpack.c.l.b16 %v274
    %v847 = vunpack.c.h.b16 %v274
    %v848 = vunpack.c.l.b16 %v275
    %v849 = vunpack.c.h.b16 %v275
    %v850 = vunpack.c.l.b16 %v276
    %v851 = vunpack.c.h.b16 %v276
    %v852 = vunpack.c.l.b16 %v277
    %v853 = vunpack.c.h.b16 %v277
    %v854 = vunpack.c.l.b16 %v278
    %v855 = vunpack.c.h.b16 %v278
    %v856 = vunpack.c.l.b16 %v279
    %v857 = vunpack.c.h.b16 %v279
    %v858 = vunpack.c.l.b16 %v280
    %v859 = vunpack.c.h.b16 %v280
    %v860 = vunpack.c.l.b16 %v281
    %v861 = vunpack.c.h.b16 %v281
    %v862 = vunpack.c.l.b16 %v282
    %v863 = vunpack.c.h.b16 %v282
    %v864 = vunpack.c.l.b16 %v283
    %v865 = vunpack.c.h.b16 %v283
    %v866 = vunpack.c.l.b16 %v284
    %v867 = vunpack.c.h.b16 %v284
    %v868 = vunpack.c.l.b16 %v285
    %v869 = vunpack.c.h.b16 %v285
    %v870 = vunpack.c.l.b16 %v286
    %v871 = vunpack.c.h.b16 %v286
    %v872 = vunpack.c.l.b16 %v287
    %v873 = vunpack.c.h.b16 %v287
    %v874 = vunpack.c.l.b16 %v288
    %v875 = vunpack.c.h.b16 %v288
    %v876 = vunpack.c.l.b16 %v289
    %v877 = vunpack.c.h.b16 %v289
    %v878 = vunpack.c.l.b16 %v290
    %v879 = vunpack.c.h.b16 %v290
    %v880 = vunpack.c.l.b16 %v291
    %v881 = vunpack.c.h.b16 %v291
    %v882 = vunpack.c.l.b16 %v292
    %v883 = vunpack.c.h.b16 %v292
    %v884 = vunpack.c.l.b16 %v293
    %v885 = vunpack.c.h.b16 %v293
    %v886 = vunpack.c.l.b16 %v294
    %v887 = vunpack.c.h.b16 %v294
    %v888 = vunpack.c.l.b16 %v295
    %v889 = vunpack.c.h.b16 %v295
    %v890 = vunpack.c.l.b16 %v296
    %v891 = vunpack.c.h.b16 %v296
    %v892 = vunpack.c.l.b16 %v297
    %v893 = vunpack.c.h.b16 %v297
    %v894 = vunpack.c.l.b16 %v298
    %v895 = vunpack.c.h.b16 %v298
    %v896 = vunpack.c.l.b16 %v299
    %v897 = vunpack.c.h.b16 %v299
    %v898 = vunpack.c.l.b16 %v300
    %v899 = vunpack.c.h.b16 %v300
    %v900 = vunpack.c.l.b16 %v301
    %v901 = vunpack.c.h.b16 %v301
    %v902 = vunpack.c.l.b16 %v302
    %v903 = vunpack.c.h.b16 %v302
    %v904 = vunpack.c.l.b16 %v303
    %v905 = vunpack.c.h.b16 %v303
    %v906 = vunpack.c.l.b16 %v304
    %v907 = vunpack.c.h.b16 %v304
    %v908 = vunpack.c.l.b16 %v305
    %v909 = vunpack.c.h.b16 %v305
    %v910 = vunpack.c.l.b16 %v306
    %v911 = vunpack.c.h.b16 %v306
    %v912 = vunpack.c.l.b16 %v307
    %v913 = vunpack.c.h.b16 %v307
    %v914 = vunpack.c.l.b16 %v308
    %v915 = vunpack.c.h.b16 %v308
    %v916 = vunpack.c.l.b16 %v309
    %v917 = vunpack.c.h.b16 %v309
    %v918 = vunpack.c.l.b16 %v310
    %v919 = vunpack.c.h.b16 %v310
    %v920 = vunpack.c.l.b16 %v311
    %v921 = vunpack.c.h.b16 %v311
    %v922 = vpack.c.b16 %v534, %v530
    %v923 = vpack.c.b16 %v535, %v531
    %v924 = vpack.c.b16 %v536, %v532
    %v925 = vpack.c.b16 %v537, %v533
    %v926 = vpack.c.b16 %v542, %v538
    %v927 = vpack.c.b16 %v543, %v539
    %v928 = vpack.c.b16 %v544, %v540
    %v929 = vpack.c.b16 %v545, %v541
    %v930 = vpack.c.b16 %v550, %v546
    %v931 = vpack.c.b16 %v551, %v547
    %v932 = vpack.c.b16 %v552, %v548
    %v933 = vpack.c.b16 %v553, %v549
    %v934 = vpack.c.b16 %v558, %v554
    %v935 = vpack.c.b16 %v559, %v555
    %v936 = vpack.c.b16 %v560, %v556
    %v937 = vpack.c.b16 %v561, %v557
    %v938 = vpack.c.b16 %v566, %v562
    %v939 = vpack.c.b16 %v567, %v563
    %v940 = vpack.c.b16 %v568, %v564
    %v941 = vpack.c.b16 %v569, %v565
    %v942 = vpack.c.b16 %v574, %v570
    %v943 = vpack.c.b16 %v575, %v571
    %v944 = vpack.c.b16 %v576, %v572
    %v945 = vpack.c.b16 %v577, %v573
    %v946 = vpack.c.b16 %v582, %v578
    %v947 = vpack.c.b16 %v583, %v579
    %v948 = vpack.c.b16 %v584, %v580
    %v949 = vpack.c.b16 %v585, %v581
    %v950 = vpack.c.b16 %v590, %v586
    %v951 = vpack.c.b16 %v591, %v587
    %v952 = vpack.c.b16 %v592, %v588
    %v953 = vpack.c.b16 %v593, %v589
    %v954 = vpack.c.b16 %v598, %v594
    %v955 = vpack.c.b16 %v599, %v595
    %v956 = vpack.c.b16 %v600, %v596
    %v957 = vpack.c.b16 %v601, %v597
    %v958 = vpack.c.b16 %v606, %v602
    %v959 = vpack.c.b16 %v607, %v603
    %v960 = vpack.c.b16 %v608, %v604
    %v961 = vpack.c.b16 %v609, %v605
    %v962 = vpack.c.b16 %v614, %v610
    %v963 = vpack.c.b16 %v615, %v611
    %v964 = vpack.c.b16 %v616, %v612
    %v965 = vpack.c.b16 %v617, %v613
    %v966 = vpack.c.b16 %v622, %v618
    %v967 = vpack.c.b16 %v623, %v619
    %v968 = vpack.c.b16 %v624, %v620
    %v969 = vpack.c.b16 %v625, %v621
    %v970 = vpack.c.b16 %v630, %v626
    %v971 = vpack.c.b16 %v631, %v627
    %v972 = vpack.c.b16 %v632, %v628
    %v973 = vpack.c.b16 %v633, %v629
    %v974 = vpack.c.b16 %v638, %v634
    %v975 = vpack.c.b16 %v639, %v635
    %v976 = vpack.c.b16 %v640, %v636
    %v977 = vpack.c.b16 %v641, %v637
    %v978 = vpack.c.b16 %v646, %v642
    %v979 = vpack.c.b16 %v647, %v643
    %v980 = vpack.c.b16 %v648, %v644
    %v981 = vpack.c.b16 %v649, %v645
    %v982 = vpack.c.b16 %v654, %v650
    %v983 = vpack.c.b16 %v655, %v651
    %v984 = vpack.c.b16 %v656, %v652
    %v985 = vpack.c.b16 %v657, %v653
    %v986 = vpack.c.b16 %v662, %v658
    %v987 = vpack.c.b16 %v663, %v659
    %v988 = vpack.c.b16 %v664, %v660
    %v989 = vpack.c.b16 %v665, %v661
    %v990 = vpack.c.b16 %v670, %v666
    %v991 = vpack.c.b16 %v671, %v667
    %v992 = vpack.c.b16 %v672, %v668
    %v993 = vpack.c.b16 %v673, %v669
    %v994 = vpack.c.b16 %v678, %v674
    %v995 = vpack.c.b16 %v679, %v675
    %v996 = vpack.c.b16 %v680, %v676
    %v997 = vpack.c.b16 %v681, %v677
    %v998 = vpack.c.b16 %v686, %v682
    %v999 = vpack.c.b16 %v687, %v683
    %v1000 = vpack.c.b16 %v688, %v684
    %v1001 = vpack.c.b16 %v689, %v685
    %v1002 = vpack.c.b16 %v694, %v690
    %v1003 = vpack.c.b16 %v695, %v691
    %v1004 = vpack.c.b16 %v696, %v692
    %v1005 = vpack.c.b16 %v697, %v693
    %v1006 = vpack.c.b16 %v702, %v698
    %v1007 = vpack.c.b16 %v703, %v699
    %v1008 = vpack.c.b16 %v704, %v700
    %v1009 = vpack.c.b16 %v705, %v701
    %v1010 = vpack.c.b16 %v710, %v706
    %v1011 = vpack.c.b16 %v711, %v707
    %v1012 = vpack.c.b16 %v712, %v708
    %v1013 = vpack.c.b16 %v713, %v709
    %v1014 = vpack.c.b16 %v718, %v714
    %v1015 = vpack.c.b16 %v719, %v715
    %v1016 = vpack.c.b16 %v720, %v716
    %v1017 = vpack.c.b16 %v721, %v717
    %v1018 = vpack.c.b16 %v726, %v722
    %v1019 = vpack.c.b16 %v727, %v723
    %v1020 = vpack.c.b16 %v728, %v724
    %v1021 = vpack.c.b16 %v729, %v725
    %v1022 = vpack.c.b16 %v734, %v730
    %v1023 = vpack.c.b16 %v735, %v731
    %v1024 = vpack.c.b16 %v736, %v732
    %v1025 = vpack.c.b16 %v737, %v733
    %v1026 = vpack.c.b16 %v742, %v738
    %v1027 = vpack.c.b16 %v743, %v739
    %v1028 = vpack.c.b16 %v744, %v740
    %v1029 = vpack.c.b16 %v745, %v741
    %v1030 = vpack.c.b16 %v750, %v746
    %v1031 = vpack.c.b16 %v751, %v747
    %v1032 = vpack.c.b16 %v752, %v748
    %v1033 = vpack.c.b16 %v753, %v749
    %v1034 = vpack.c.b16 %v758, %v754
    %v1035 = vpack.c.b16 %v759, %v755
    %v1036 = vpack.c.b16 %v760, %v756
    %v1037 = vpack.c.b16 %v761, %v757
    %v1038 = vpack.c.b16 %v766, %v762
    %v1039 = vpack.c.b16 %v767, %v763
    %v1040 = vpack.c.b16 %v768, %v764
    %v1041 = vpack.c.b16 %v769, %v765
    %v1042 = vpack.c.b16 %v774, %v770
    %v1043 = vpack.c.b16 %v775, %v771
    %v1044 = vpack.c.b16 %v776, %v772
    %v1045 = vpack.c.b16 %v777, %v773
    %v1046 = vpack.c.b16 %v782, %v778
    %v1047 = vpack.c.b16 %v783, %v779
    %v1048 = vpack.c.b16 %v784, %v780
    %v1049 = vpack.c.b16 %v785, %v781
    %v1050 = vpack.c.b16 %v790, %v786
    %v1051 = vpack.c.b16 %v791, %v787
    %v1052 = vpack.c.b16 %v792, %v788
    %v1053 = vpack.c.b16 %v793, %v789
    %v1054 = vpack.c.b16 %v798, %v794
    %v1055 = vpack.c.b16 %v799, %v795
    %v1056 = vpack.c.b16 %v800, %v796
    %v1057 = vpack.c.b16 %v801, %v797
    %v1058 = vpack.c.b16 %v806, %v802
    %v1059 = vpack.c.b16 %v807, %v803
    %v1060 = vpack.c.b16 %v808, %v804
    %v1061 = vpack.c.b16 %v809, %v805
    %v1062 = vpack.c.b16 %v814, %v810
    %v1063 = vpack.c.b16 %v815, %v811
    %v1064 = vpack.c.b16 %v816, %v812
    %v1065 = vpack.c.b16 %v817, %v813
    %v1066 = vpack.c.b16 %v822, %v818
    %v1067 = vpack.c.b16 %v823, %v819
    %v1068 = vpack.c.b16 %v824, %v820
    %v1069 = vpack.c.b16 %v825, %v821
    %v1070 = vpack.c.b16 %v830, %v826
    %v1071 = vpack.c.b16 %v831, %v827
    %v1072 = vpack.c.b16 %v832, %v828
    %v1073 = vpack.c.b16 %v833, %v829
    %v1074 = vpack.c.b16 %v838, %v834
    %v1075 = vpack.c.b16 %v839, %v835
    %v1076 = vpack.c.b16 %v840, %v836
    %v1077 = vpack.c.b16 %v841, %v837
    %v1078 = vpack.c.b16 %v846, %v842
    %v1079 = vpack.c.b16 %v847, %v843
    %v1080 = vpack.c.b16 %v848, %v844
    %v1081 = vpack.c.b16 %v849, %v845
    %v1082 = vpack.c.b16 %v854, %v850
    %v1083 = vpack.c.b16 %v855, %v851
    %v1084 = vpack.c.b16 %v856, %v852
    %v1085 = vpack.c.b16 %v857, %v853
    %v1086 = vpack.c.b16 %v862, %v858
    %v1087 = vpack.c.b16 %v863, %v859
    %v1088 = vpack.c.b16 %v864, %v860
    %v1089 = vpack.c.b16 %v865, %v861
    %v1090 = vpack.c.b16 %v870, %v866
    %v1091 = vpack.c.b16 %v871, %v867
    %v1092 = vpack.c.b16 %v872, %v868
    %v1093 = vpack.c.b16 %v873, %v869
    %v1094 = vpack.c.b16 %v878, %v874
    %v1095 = vpack.c.b16 %v879, %v875
    %v1096 = vpack.c.b16 %v880, %v876
    %v1097 = vpack.c.b16 %v881, %v877
    %v1098 = vpack.c.b16 %v886, %v882
    %v1099 = vpack.c.b16 %v887, %v883
    %v1100 = vpack.c.b16 %v888, %v884
    %v1101 = vpack.c.b16 %v889, %v885
    %v1102 = vpack.c.b16 %v894, %v890
    %v1103 = vpack.c.b16 %v895, %v891
    %v1104 = vpack.c.b16 %v896, %v892
    %v1105 = vpack.c.b16 %v897, %v893
    %v1106 = vpack.c.b16 %v902, %v898
    %v1107 = vpack.c.b16 %v903, %v899
    %v1108 = vpack.c.b16 %v904, %v900
    %v1109 = vpack.c.b16 %v905, %v901
    %v1110 = vpack.c.b16 %v910, %v906
    %v1111 = vpack.c.b16 %v911, %v907
    %v1112 = vpack.c.b16 %v912, %v908
    %v1113 = vpack.c.b16 %v913, %v909
    %v1114 = vpack.c.b16 %v918, %v914
    %v1115 = vpack.c.b16 %v919, %v915
    %v1116 = vpack.c.b16 %v920, %v916
    %v1117 = vpack.c.b16 %v921, %v917
    %vm1314 = vcmask 130048
    %v1316 = vsel %vm1314, %v115, 0
    %1318 = vmatprep.subr.bf16.mxu0 %v923
    %1319 = vmatpush1.bf16.msra.mxu0 %v922
    %1320 = vmatprep.subr.bf16.mxu0 %v927
    %1321 = vmatpush1.bf16.msra.mxu0 %v926
    %1322 = vmatprep.subr.bf16.mxu0 %v931
    %1323 = vmatpush1.bf16.msra.mxu0 %v930
    %1324 = vmatprep.subr.bf16.mxu0 %v935
    %1325 = vmatpush1.bf16.msra.mxu0 %v934
    %1326 = vmatprep.subr.bf16.mxu0 %v939
    %1327 = vmatpush1.bf16.msra.mxu0 %v938
    %1328 = vmatprep.subr.bf16.mxu0 %v943
    %1329 = vmatpush1.bf16.msra.mxu0 %v942
    %1330 = vmatprep.subr.bf16.mxu0 %v947
    %1331 = vmatpush1.bf16.msra.mxu0 %v946
    %1332 = vmatprep.subr.bf16.mxu0 %v951
    %1333 = vmatpush1.bf16.msra.mxu0 %v950
    %1334 = vmatprep.subr.bf16.mxu0 %v955
    %1335 = vmatpush1.bf16.msra.mxu0 %v954
    %1336 = vmatprep.subr.bf16.mxu0 %v959
    %1337 = vmatpush1.bf16.msra.mxu0 %v958
    %1338 = vmatprep.subr.bf16.mxu0 %v963
    %1339 = vmatpush1.bf16.msra.mxu0 %v962
    %1340 = vmatprep.subr.bf16.mxu0 %v967
    %1341 = vmatpush1.bf16.msra.mxu0 %v966
    %1342 = vmatprep.subr.bf16.mxu0 %v971
    %1343 = vmatpush1.bf16.msra.mxu0 %v970
    %1344 = vmatprep.subr.bf16.mxu0 %v975
    %1345 = vmatpush1.bf16.msra.mxu0 %v974
    %1346 = vmatprep.subr.bf16.mxu0 %v979
    %1347 = vmatpush1.bf16.msra.mxu0 %v978
    %1348 = vmatprep.subr.bf16.mxu0 %v983
    %1349 = vmatpush1.bf16.msra.mxu0 %v982
    %1350 = vmatprep.mubr.bf16.mxu0 %v110
    %1351 = vmatmul.mubr.bf16.gmra.mrb[0].mxu0 %v109
    %v1352 = vpop.f32.mrb[0].mxu0
    %v1353 = vadd.f32 %v317, %v1352
    %v1354 = vpop.f32.mrb[0].mxu0
    %v1355 = vadd.f32 %v321, %v1354
    %v1356 = vpop.f32.mrb[0].mxu0
    %v1357 = vadd.f32 %v317, %v1356
    %v1358 = vpop.f32.mrb[0].mxu0
    %v1359 = vadd.f32 %v321, %v1358
    %1360 = vdwg.mxu0
    %1361 = vmatprep.subr.bf16.mxu0 %v987
    %1362 = vmatpush1.bf16.msra.mxu0 %v986
    %1363 = vmatprep.subr.bf16.mxu0 %v991
    %1364 = vmatpush1.bf16.msra.mxu0 %v990
    %1365 = vmatprep.subr.bf16.mxu0 %v995
    %1366 = vmatpush1.bf16.msra.mxu0 %v994
    %1367 = vmatprep.subr.bf16.mxu0 %v999
    %1368 = vmatpush1.bf16.msra.mxu0 %v998
    %1369 = vmatprep.subr.bf16.mxu0 %v1003
    %1370 = vmatpush1.bf16.msra.mxu0 %v1002
    %1371 = vmatprep.subr.bf16.mxu0 %v1007
    %1372 = vmatpush1.bf16.msra.mxu0 %v1006
    %1373 = vmatprep.subr.bf16.mxu0 %v1011
    %1374 = vmatpush1.bf16.msra.mxu0 %v1010
    %1375 = vmatprep.subr.bf16.mxu0 %v1015
    %1376 = vmatpush1.bf16.msra.mxu0 %v1014
    %1377 = vmatprep.subr.bf16.mxu0 %v1019
    %1378 = vmatpush1.bf16.msra.mxu0 %v1018
    %1379 = vmatprep.subr.bf16.mxu0 %v1023
    %1380 = vmatpush1.bf16.msra.mxu0 %v1022
    %1381 = vmatprep.subr.bf16.mxu0 %v1027
    %1382 = vmatpush1.bf16.msra.mxu0 %v1026
    %1383 = vmatprep.subr.bf16.mxu0 %v1031
    %1384 = vmatpush1.bf16.msra.mxu0 %v1030
    %1385 = vmatprep.subr.bf16.mxu0 %v1035
    %1386 = vmatpush1.bf16.msra.mxu0 %v1034
    %1387 = vmatprep.subr.bf16.mxu0 %v1039
    %1388 = vmatpush1.bf16.msra.mxu0 %v1038
    %1389 = vmatprep.subr.bf16.mxu0 %v1043
    %1390 = vmatpush1.bf16.msra.mxu0 %v1042
    %1391 = vmatprep.subr.bf16.mxu0 %v1047
    %1392 = vmatpush1.bf16.msra.mxu0 %v1046
    %1393 = vmatprep.mubr.bf16.mxu0 %v112
    %1394 = vmatmul.mubr.bf16.gmra.mrb[0].mxu0 %v111
    %v1395 = vpop.f32.mrb[0].mxu0
    %v1396 = vadd.f32 %v1353, %v1395
    %v1397 = vpop.f32.mrb[0].mxu0
    %v1398 = vadd.f32 %v1355, %v1397
    %v1399 = vpop.f32.mrb[0].mxu0
    %v1400 = vadd.f32 %v1357, %v1399
    %v1401 = vpop.f32.mrb[0].mxu0
    %v1402 = vadd.f32 %v1359, %v1401
    %1403 = vdwg.mxu0
    %1404 = vmatprep.subr.bf16.mxu0 %v1051
    %1405 = vmatpush1.bf16.msra.mxu0 %v1050
    %1406 = vmatprep.subr.bf16.mxu0 %v1055
    %1407 = vmatpush1.bf16.msra.mxu0 %v1054
    %1408 = vmatprep.subr.bf16.mxu0 %v1059
    %1409 = vmatpush1.bf16.msra.mxu0 %v1058
    %1410 = vmatprep.subr.bf16.mxu0 %v1063
    %1411 = vmatpush1.bf16.msra.mxu0 %v1062
    %1412 = vmatprep.subr.bf16.mxu0 %v1067
    %1413 = vmatpush1.bf16.msra.mxu0 %v1066
    %1414 = vmatprep.subr.bf16.mxu0 %v1071
    %1415 = vmatpush1.bf16.msra.mxu0 %v1070
    %1416 = vmatprep.subr.bf16.mxu0 %v1075
    %1417 = vmatpush1.bf16.msra.mxu0 %v1074
    %1418 = vmatprep.subr.bf16.mxu0 %v1079
    %1419 = vmatpush1.bf16.msra.mxu0 %v1078
    %1420 = vmatprep.subr.bf16.mxu0 %v1083
    %1421 = vmatpush1.bf16.msra.mxu0 %v1082
    %1422 = vmatprep.subr.bf16.mxu0 %v1087
    %1423 = vmatpush1.bf16.msra.mxu0 %v1086
    %1424 = vmatprep.subr.bf16.mxu0 %v1091
    %1425 = vmatpush1.bf16.msra.mxu0 %v1090
    %1426 = vmatprep.subr.bf16.mxu0 %v1095
    %1427 = vmatpush1.bf16.msra.mxu0 %v1094
    %1428 = vmatprep.subr.bf16.mxu0 %v1099
    %1429 = vmatpush1.bf16.msra.mxu0 %v1098
    %1430 = vmatprep.subr.bf16.mxu0 %v1103
    %1431 = vmatpush1.bf16.msra.mxu0 %v1102
    %1432 = vmatprep.subr.bf16.mxu0 %v1107
    %1433 = vmatpush1.bf16.msra.mxu0 %v1106
    %1434 = vmatprep.subr.bf16.mxu0 %v1111
    %1435 = vmatpush1.bf16.msra.mxu0 %v1110
    %1436 = vmatprep.mubr.bf16.mxu0 %v114
    %1437 = vmatmul.mubr.bf16.gmra.mrb[0].mxu0 %v113
    %v1438 = vpop.f32.mrb[0].mxu0
    %v1439 = vadd.f32 %v1396, %v1438
    %v1440 = vpop.f32.mrb[0].mxu0
    %v1441 = vadd.f32 %v1398, %v1440
    %v1442 = vpop.f32.mrb[0].mxu0
    %v1443 = vadd.f32 %v1400, %v1442
    %v1444 = vpop.f32.mrb[0].mxu0
    %v1445 = vadd.f32 %v1402, %v1444
    %1446 = vdwg.mxu0
    %1447 = vmatprep.subr.bf16.mxu0 %v1115
    %1448 = vmatpush1.bf16.msra.mxu0 %v1114
    %1449 = vmatprep.subr.bf16.mxu0 0
    %1450 = vmatpush1.bf16.msra.mxu0 0
    %1451 = vmatprep.subr.bf16.mxu0 0
    %1452 = vmatpush1.bf16.msra.mxu0 0
    %1453 = vmatprep.subr.bf16.mxu0 0
    %1454 = vmatpush1.bf16.msra.mxu0 0
    %1455 = vmatprep.subr.bf16.mxu0 0
    %1456 = vmatpush1.bf16.msra.mxu0 0
    %1457 = vmatprep.subr.bf16.mxu0 0
    %1458 = vmatpush1.bf16.msra.mxu0 0
    %1459 = vmatprep.subr.bf16.mxu0 0
    %1460 = vmatpush1.bf16.msra.mxu0 0
    %1461 = vmatprep.subr.bf16.mxu0 0
    %1462 = vmatpush1.bf16.msra.mxu0 0
    %1463 = vmatprep.subr.bf16.mxu0 0
    %1464 = vmatpush1.bf16.msra.mxu0 0
    %1465 = vmatprep.subr.bf16.mxu0 0
    %1466 = vmatpush1.bf16.msra.mxu0 0
    %1467 = vmatprep.subr.bf16.mxu0 0
    %1468 = vmatpush1.bf16.msra.mxu0 0
    %1469 = vmatprep.subr.bf16.mxu0 0
    %1470 = vmatpush1.bf16.msra.mxu0 0
    %1471 = vmatprep.subr.bf16.mxu0 0
    %1472 = vmatpush1.bf16.msra.mxu0 0
    %1473 = vmatprep.subr.bf16.mxu0 0
    %1474 = vmatpush1.bf16.msra.mxu0 0
    %1475 = vmatprep.subr.bf16.mxu0 0
    %1476 = vmatpush1.bf16.msra.mxu0 0
    %1477 = vmatprep.subr.bf16.mxu0 0
    %1478 = vmatpush1.bf16.msra.mxu0 0
    %1479 = vmatprep.mubr.bf16.mxu0 0
    %1480 = vmatmul.mubr.bf16.gmra.mrb[0].mxu0 %v1316
    %v1481 = vpop.f32.mrb[0].mxu0
    %v1482 = vadd.f32 %v1439, %v1481
    %v1483 = vpop.f32.mrb[0].mxu0
    %v1484 = vadd.f32 %v1441, %v1483
    %v1485 = vpop.f32.mrb[0].mxu0
    %v1486 = vadd.f32 %v1443, %v1485
    %v1487 = vpop.f32.mrb[0].mxu0
    %v1488 = vadd.f32 %v1445, %v1487
    %1489 = vdwg.mxu0
    %1490 = vmatprep.subr.bf16.mxu0 %v925
    %1491 = vmatpush1.bf16.msra.mxu0 %v924
    %1492 = vmatprep.subr.bf16.mxu0 %v929
    %1493 = vmatpush1.bf16.msra.mxu0 %v928
    %1494 = vmatprep.subr.bf16.mxu0 %v933
    %1495 = vmatpush1.bf16.msra.mxu0 %v932
    %1496 = vmatprep.subr.bf16.mxu0 %v937
    %1497 = vmatpush1.bf16.msra.mxu0 %v936
    %1498 = vmatprep.subr.bf16.mxu0 %v941
    %1499 = vmatpush1.bf16.msra.mxu0 %v940
    %1500 = vmatprep.subr.bf16.mxu0 %v945
    %1501 = vmatpush1.bf16.msra.mxu0 %v944
    %1502 = vmatprep.subr.bf16.mxu0 %v949
    %1503 = vmatpush1.bf16.msra.mxu0 %v948
    %1504 = vmatprep.subr.bf16.mxu0 %v953
    %1505 = vmatpush1.bf16.msra.mxu0 %v952
    %1506 = vmatprep.subr.bf16.mxu0 %v957
    %1507 = vmatpush1.bf16.msra.mxu0 %v956
    %1508 = vmatprep.subr.bf16.mxu0 %v961
    %1509 = vmatpush1.bf16.msra.mxu0 %v960
    %1510 = vmatprep.subr.bf16.mxu0 %v965
    %1511 = vmatpush1.bf16.msra.mxu0 %v964
    %1512 = vmatprep.subr.bf16.mxu0 %v969
    %1513 = vmatpush1.bf16.msra.mxu0 %v968
    %1514 = vmatprep.subr.bf16.mxu0 %v973
    %1515 = vmatpush1.bf16.msra.mxu0 %v972
    %1516 = vmatprep.subr.bf16.mxu0 %v977
    %1517 = vmatpush1.bf16.msra.mxu0 %v976
    %1518 = vmatprep.subr.bf16.mxu0 %v981
    %1519 = vmatpush1.bf16.msra.mxu0 %v980
    %1520 = vmatprep.subr.bf16.mxu0 %v985
    %1521 = vmatpush1.bf16.msra.mxu0 %v984
    %1522 = vmatprep.mubr.bf16.mxu0 %v110
    %1523 = vmatmul.mubr.bf16.gmra.mrb[0].mxu0 %v109
    %v1524 = vpop.f32.mrb[0].mxu0
    %v1525 = vadd.f32 %v325, %v1524
    %v1526 = vpop.f32.mrb[0].mxu0
    %v1527 = vadd.f32 %v329, %v1526
    %v1528 = vpop.f32.mrb[0].mxu0
    %v1529 = vadd.f32 %v325, %v1528
    %v1530 = vpop.f32.mrb[0].mxu0
    %v1531 = vadd.f32 %v329, %v1530
    %1532 = vdwg.mxu0
    %1533 = vmatprep.subr.bf16.mxu0 %v989
    %1534 = vmatpush1.bf16.msra.mxu0 %v988
    %1535 = vmatprep.subr.bf16.mxu0 %v993
    %1536 = vmatpush1.bf16.msra.mxu0 %v992
    %1537 = vmatprep.subr.bf16.mxu0 %v997
    %1538 = vmatpush1.bf16.msra.mxu0 %v996
    %1539 = vmatprep.subr.bf16.mxu0 %v1001
    %1540 = vmatpush1.bf16.msra.mxu0 %v1000
    %1541 = vmatprep.subr.bf16.mxu0 %v1005
    %1542 = vmatpush1.bf16.msra.mxu0 %v1004
    %1543 = vmatprep.subr.bf16.mxu0 %v1009
    %1544 = vmatpush1.bf16.msra.mxu0 %v1008
    %1545 = vmatprep.subr.bf16.mxu0 %v1013
    %1546 = vmatpush1.bf16.msra.mxu0 %v1012
    %1547 = vmatprep.subr.bf16.mxu0 %v1017
    %1548 = vmatpush1.bf16.msra.mxu0 %v1016
    %1549 = vmatprep.subr.bf16.mxu0 %v1021
    %1550 = vmatpush1.bf16.msra.mxu0 %v1020
    %1551 = vmatprep.subr.bf16.mxu0 %v1025
    %1552 = vmatpush1.bf16.msra.mxu0 %v1024
    %1553 = vmatprep.subr.bf16.mxu0 %v1029
    %1554 = vmatpush1.bf16.msra.mxu0 %v1028
    %1555 = vmatprep.subr.bf16.mxu0 %v1033
    %1556 = vmatpush1.bf16.msra.mxu0 %v1032
    %1557 = vmatprep.subr.bf16.mxu0 %v1037
    %1558 = vmatpush1.bf16.msra.mxu0 %v1036
    %1559 = vmatprep.subr.bf16.mxu0 %v1041
    %1560 = vmatpush1.bf16.msra.mxu0 %v1040
    %1561 = vmatprep.subr.bf16.mxu0 %v1045
    %1562 = vmatpush1.bf16.msra.mxu0 %v1044
    %1563 = vmatprep.subr.bf16.mxu0 %v1049
    %1564 = vmatpush1.bf16.msra.mxu0 %v1048
    %1565 = vmatprep.mubr.bf16.mxu0 %v112
    %1566 = vmatmul.mubr.bf16.gmra.mrb[0].mxu0 %v111
    %v1567 = vpop.f32.mrb[0].mxu0
    %v1568 = vadd.f32 %v1525, %v1567
    %v1569 = vpop.f32.mrb[0].mxu0
    %v1570 = vadd.f32 %v1527, %v1569
    %v1571 = vpop.f32.mrb[0].mxu0
    %v1572 = vadd.f32 %v1529, %v1571
    %v1573 = vpop.f32.mrb[0].mxu0
    %v1574 = vadd.f32 %v1531, %v1573
    %1575 = vdwg.mxu0
    %1576 = vmatprep.subr.bf16.mxu0 %v1053
    %1577 = vmatpush1.bf16.msra.mxu0 %v1052
    %1578 = vmatprep.subr.bf16.mxu0 %v1057
    %1579 = vmatpush1.bf16.msra.mxu0 %v1056
    %1580 = vmatprep.subr.bf16.mxu0 %v1061
    %1581 = vmatpush1.bf16.msra.mxu0 %v1060
    %1582 = vmatprep.subr.bf16.mxu0 %v1065
    %1583 = vmatpush1.bf16.msra.mxu0 %v1064
    %1584 = vmatprep.subr.bf16.mxu0 %v1069
    %1585 = vmatpush1.bf16.msra.mxu0 %v1068
    %1586 = vmatprep.subr.bf16.mxu0 %v1073
    %1587 = vmatpush1.bf16.msra.mxu0 %v1072
    %1588 = vmatprep.subr.bf16.mxu0 %v1077
    %1589 = vmatpush1.bf16.msra.mxu0 %v1076
    %1590 = vmatprep.subr.bf16.mxu0 %v1081
    %1591 = vmatpush1.bf16.msra.mxu0 %v1080
    %1592 = vmatprep.subr.bf16.mxu0 %v1085
    %1593 = vmatpush1.bf16.msra.mxu0 %v1084
    %1594 = vmatprep.subr.bf16.mxu0 %v1089
    %1595 = vmatpush1.bf16.msra.mxu0 %v1088
    %1596 = vmatprep.subr.bf16.mxu0 %v1093
    %1597 = vmatpush1.bf16.msra.mxu0 %v1092
    %1598 = vmatprep.subr.bf16.mxu0 %v1097
    %1599 = vmatpush1.bf16.msra.mxu0 %v1096
    %1600 = vmatprep.subr.bf16.mxu0 %v1101
    %1601 = vmatpush1.bf16.msra.mxu0 %v1100
    %1602 = vmatprep.subr.bf16.mxu0 %v1105
    %1603 = vmatpush1.bf16.msra.mxu0 %v1104
    %1604 = vmatprep.subr.bf16.mxu0 %v1109
    %1605 = vmatpush1.bf16.msra.mxu0 %v1108
    %1606 = vmatprep.subr.bf16.mxu0 %v1113
    %1607 = vmatpush1.bf16.msra.mxu0 %v1112
    %1608 = vmatprep.mubr.bf16.mxu0 %v114
    %1609 = vmatmul.mubr.bf16.gmra.mrb[0].mxu0 %v113
    %v1610 = vpop.f32.mrb[0].mxu0
    %v1611 = vadd.f32 %v1568, %v1610
    %v1612 = vpop.f32.mrb[0].mxu0
    %v1613 = vadd.f32 %v1570, %v1612
    %v1614 = vpop.f32.mrb[0].mxu0
    %v1615 = vadd.f32 %v1572, %v1614
    %v1616 = vpop.f32.mrb[0].mxu0
    %v1617 = vadd.f32 %v1574, %v1616
    %1618 = vdwg.mxu0
    %1619 = vmatprep.subr.bf16.mxu0 %v1117
    %1620 = vmatpush1.bf16.msra.mxu0 %v1116
    %1621 = vmatprep.subr.bf16.mxu0 0
    %1622 = vmatpush1.bf16.msra.mxu0 0
    %1623 = vmatprep.subr.bf16.mxu0 0
    %1624 = vmatpush1.bf16.msra.mxu0 0
    %1625 = vmatprep.subr.bf16.mxu0 0
    %1626 = vmatpush1.bf16.msra.mxu0 0
    %1627 = vmatprep.subr.bf16.mxu0 0
    %1628 = vmatpush1.bf16.msra.mxu0 0
    %1629 = vmatprep.subr.bf16.mxu0 0
    %1630 = vmatpush1.bf16.msra.mxu0 0
    %1631 = vmatprep.subr.bf16.mxu0 0
    %1632 = vmatpush1.bf16.msra.mxu0 0
    %1633 = vmatprep.subr.bf16.mxu0 0
    %1634 = vmatpush1.bf16.msra.mxu0 0
    %1635 = vmatprep.subr.bf16.mxu0 0
    %1636 = vmatpush1.bf16.msra.mxu0 0
    %1637 = vmatprep.subr.bf16.mxu0 0
    %1638 = vmatpush1.bf16.msra.mxu0 0
    %1639 = vmatprep.subr.bf16.mxu0 0
    %1640 = vmatpush1.bf16.msra.mxu0 0
    %1641 = vmatprep.subr.bf16.mxu0 0
    %1642 = vmatpush1.bf16.msra.mxu0 0
    %1643 = vmatprep.subr.bf16.mxu0 0
    %1644 = vmatpush1.bf16.msra.mxu0 0
    %1645 = vmatprep.subr.bf16.mxu0 0
    %1646 = vmatpush1.bf16.msra.mxu0 0
    %1647 = vmatprep.subr.bf16.mxu0 0
    %1648 = vmatpush1.bf16.msra.mxu0 0
    %1649 = vmatprep.subr.bf16.mxu0 0
    %1650 = vmatpush1.bf16.msra.mxu0 0
    %1651 = vmatprep.mubr.bf16.mxu0 0
    %1652 = vmatmul.mubr.bf16.gmra.mrb[0].mxu0 %v1316
    %v1653 = vpop.f32.mrb[0].mxu0
    %v1654 = vadd.f32 %v1611, %v1653
    %v1655 = vpop.f32.mrb[0].mxu0
    %v1656 = vadd.f32 %v1613, %v1655
    %v1657 = vpop.f32.mrb[0].mxu0
    %v1658 = vadd.f32 %v1615, %v1657
    %v1659 = vpop.f32.mrb[0].mxu0
    %v1660 = vadd.f32 %v1617, %v1659
    %1661 = vdwg.mxu0
    %v1662 = vmax.f32 %v1482, 0.0
    %v1663 = vmax.f32 %v1484, 0.0
    %v1664 = vmax.f32 %v1654, 0.0
    %v1665 = vmax.f32 %v1656, 0.0
    %v1666 = vmax.f32 %v1486, 0.0
    %v1667 = vmax.f32 %v1488, 0.0
    %v1668 = vmax.f32 %v1658, 0.0
    %v1669 = vmax.f32 %v1660, 0.0
    %v1670 = vpack.c.bf16 %v1666, %v1662
    %v1671 = vpack.c.bf16 %v1667, %v1663
    %v1672 = vpack.c.bf16 %v1668, %v1664
    %v1673 = vpack.c.bf16 %v1669, %v1665
    %v1674 = vld [vmem:[#allocation7] sm:$0xff]
    %v1675 = vld [vmem:[#allocation7 + $0x8] sm:$0xff]
    %v1676 = vld [vmem:[#allocation7 + $0x10] sm:$0xff]
    %v1677 = vld [vmem:[#allocation7 + $0x18] sm:$0xff]
    %v1678 = vld [vmem:[#allocation7 + $0x20] sm:$0xff]
    %v1679 = vld [vmem:[#allocation7 + $0x28] sm:$0xff]
    %v1680 = vld [vmem:[#allocation7 + $0x30] sm:$0xff]
    %v1681 = vld [vmem:[#allocation7 + $0x38] sm:$0xff]
    %v1682 = vld [vmem:[#allocation7 + $0x40] sm:$0xff]
    %v1683 = vld [vmem:[#allocation7 + $0x48] sm:$0xff]
    %v1684 = vld [vmem:[#allocation7 + $0x50] sm:$0xff]
    %v1685 = vld [vmem:[#allocation7 + $0x58] sm:$0xff]
    %v1686 = vld [vmem:[#allocation7 + $0x60] sm:$0xff]
    %v1687 = vld [vmem:[#allocation7 + $0x68] sm:$0xff]
    %v1688 = vld [vmem:[#allocation7 + $0x70] sm:$0xff]
    %v1689 = vld [vmem:[#allocation7 + $0x78] sm:$0xff]
    %v1690 = vld [vmem:[#allocation7 + $0x80] sm:$0xff]
    %v1691 = vld [vmem:[#allocation7 + $0x88] sm:$0xff]
    %v1692 = vld [vmem:[#allocation7 + $0x90] sm:$0xff]
    %v1693 = vld [vmem:[#allocation7 + $0x98] sm:$0xff]
    %v1694 = vld [vmem:[#allocation7 + $0xa0] sm:$0xff]
    %v1695 = vld [vmem:[#allocation7 + $0xa8] sm:$0xff]
    %v1696 = vld [vmem:[#allocation7 + $0xb0] sm:$0xff]
    %v1697 = vld [vmem:[#allocation7 + $0xb8] sm:$0xff]
    %v1698 = vld [vmem:[#allocation7 + $0xc0] sm:$0xff]
    %v1699 = vld [vmem:[#allocation7 + $0xc8] sm:$0xff]
    %v1700 = vld [vmem:[#allocation7 + $0xd0] sm:$0xff]
    %v1701 = vld [vmem:[#allocation7 + $0xd8] sm:$0xff]
    %v1702 = vld [vmem:[#allocation7 + $0xe0] sm:$0xff]
    %v1703 = vld [vmem:[#allocation7 + $0xe8] sm:$0xff]
    %v1704 = vld [vmem:[#allocation7 + $0xf0] sm:$0xff]
    %v1705 = vld [vmem:[#allocation7 + $0xf8] sm:$0xff]
    %v1706 = vld [vmem:[#allocation7 + $0x100] sm:$0xff]
    %v1707 = vld [vmem:[#allocation7 + $0x108] sm:$0xff]
    %v1708 = vld [vmem:[#allocation7 + $0x110] sm:$0xff]
    %v1709 = vld [vmem:[#allocation7 + $0x118] sm:$0xff]
    %v1710 = vld [vmem:[#allocation7 + $0x120] sm:$0xff]
    %v1711 = vld [vmem:[#allocation7 + $0x128] sm:$0xff]
    %v1712 = vld [vmem:[#allocation7 + $0x130] sm:$0xff]
    %v1713 = vld [vmem:[#allocation7 + $0x138] sm:$0xff]
    %v1714 = vld [vmem:[#allocation7 + $0x140] sm:$0xff]
    %v1715 = vld [vmem:[#allocation7 + $0x148] sm:$0xff]
    %v1716 = vld [vmem:[#allocation7 + $0x150] sm:$0xff]
    %v1717 = vld [vmem:[#allocation7 + $0x158] sm:$0xff]
    %v1718 = vld [vmem:[#allocation7 + $0x160] sm:$0xff]
    %v1719 = vld [vmem:[#allocation7 + $0x168] sm:$0xff]
    %v1720 = vld [vmem:[#allocation7 + $0x170] sm:$0xff]
    %v1721 = vld [vmem:[#allocation7 + $0x178] sm:$0xff]
    %v1722 = vld [vmem:[#allocation7 + $0x180] sm:$0xff]
    %v1723 = vld [vmem:[#allocation7 + $0x188] sm:$0xff]
    %v1724 = vld [vmem:[#allocation7 + $0x190] sm:$0xff]
    %v1725 = vld [vmem:[#allocation7 + $0x198] sm:$0xff]
    %v1726 = vld [vmem:[#allocation7 + $0x1a0] sm:$0xff]
    %v1727 = vld [vmem:[#allocation7 + $0x1a8] sm:$0xff]
    %v1728 = vld [vmem:[#allocation7 + $0x1b0] sm:$0xff]
    %v1729 = vld [vmem:[#allocation7 + $0x1b8] sm:$0xff]
    %v1730 = vld [vmem:[#allocation7 + $0x1c0] sm:$0xff]
    %v1731 = vld [vmem:[#allocation7 + $0x1c8] sm:$0xff]
    %v1732 = vld [vmem:[#allocation7 + $0x1d0] sm:$0xff]
    %v1733 = vld [vmem:[#allocation7 + $0x1d8] sm:$0xff]
    %v1734 = vld [vmem:[#allocation7 + $0x1e0] sm:$0xff]
    %v1735 = vld [vmem:[#allocation7 + $0x1e8] sm:$0xff]
    %v1736 = vld [vmem:[#allocation7 + $0x1f0] sm:$0xff]
    %v1737 = vld [vmem:[#allocation7 + $0x1f8] sm:$0xff]
    %v1738 = vld [vmem:[%s4] sm:$0x3]
    %v1740 = vlaneseq
    %v1741 = vshrl.u32 %v1740, 7
    %v1742 = vsub.s32 0, %v1741
    %v1743 = vrot.slane %v1738, %v1742
    %v1744 = vlaneseq
    %v1745 = vshrl.u32 %v1744, 7
    %v1746 = vsub.s32 1, %v1745
    %v1747 = vrot.slane %v1738, %v1746
    %v1814 = vunpack.c.l.b16 %v1674
    %v1815 = vunpack.c.h.b16 %v1674
    %v1816 = vunpack.c.l.b16 %v1675
    %v1817 = vunpack.c.h.b16 %v1675
    %v1818 = vunpack.c.l.b16 %v1676
    %v1819 = vunpack.c.h.b16 %v1676
    %v1820 = vunpack.c.l.b16 %v1677
    %v1821 = vunpack.c.h.b16 %v1677
    %v1822 = vunpack.c.l.b16 %v1678
    %v1823 = vunpack.c.h.b16 %v1678
    %v1824 = vunpack.c.l.b16 %v1679
    %v1825 = vunpack.c.h.b16 %v1679
    %v1826 = vunpack.c.l.b16 %v1680
    %v1827 = vunpack.c.h.b16 %v1680
    %v1828 = vunpack.c.l.b16 %v1681
    %v1829 = vunpack.c.h.b16 %v1681
    %v1830 = vunpack.c.l.b16 %v1682
    %v1831 = vunpack.c.h.b16 %v1682
    %v1832 = vunpack.c.l.b16 %v1683
    %v1833 = vunpack.c.h.b16 %v1683
    %v1834 = vunpack.c.l.b16 %v1684
    %v1835 = vunpack.c.h.b16 %v1684
    %v1836 = vunpack.c.l.b16 %v1685
    %v1837 = vunpack.c.h.b16 %v1685
    %v1838 = vunpack.c.l.b16 %v1686
    %v1839 = vunpack.c.h.b16 %v1686
    %v1840 = vunpack.c.l.b16 %v1687
    %v1841 = vunpack.c.h.b16 %v1687
    %v1842 = vunpack.c.l.b16 %v1688
    %v1843 = vunpack.c.h.b16 %v1688
    %v1844 = vunpack.c.l.b16 %v1689
    %v1845 = vunpack.c.h.b16 %v1689
    %v1846 = vunpack.c.l.b16 %v1690
    %v1847 = vunpack.c.h.b16 %v1690
    %v1848 = vunpack.c.l.b16 %v1691
    %v1849 = vunpack.c.h.b16 %v1691
    %v1850 = vunpack.c.l.b16 %v1692
    %v1851 = vunpack.c.h.b16 %v1692
    %v1852 = vunpack.c.l.b16 %v1693
    %v1853 = vunpack.c.h.b16 %v1693
    %v1854 = vunpack.c.l.b16 %v1694
    %v1855 = vunpack.c.h.b16 %v1694
    %v1856 = vunpack.c.l.b16 %v1695
    %v1857 = vunpack.c.h.b16 %v1695
    %v1858 = vunpack.c.l.b16 %v1696
    %v1859 = vunpack.c.h.b16 %v1696
    %v1860 = vunpack.c.l.b16 %v1697
    %v1861 = vunpack.c.h.b16 %v1697
    %v1862 = vunpack.c.l.b16 %v1698
    %v1863 = vunpack.c.h.b16 %v1698
    %v1864 = vunpack.c.l.b16 %v1699
    %v1865 = vunpack.c.h.b16 %v1699
    %v1866 = vunpack.c.l.b16 %v1700
    %v1867 = vunpack.c.h.b16 %v1700
    %v1868 = vunpack.c.l.b16 %v1701
    %v1869 = vunpack.c.h.b16 %v1701
    %v1870 = vunpack.c.l.b16 %v1702
    %v1871 = vunpack.c.h.b16 %v1702
    %v1872 = vunpack.c.l.b16 %v1703
    %v1873 = vunpack.c.h.b16 %v1703
    %v1874 = vunpack.c.l.b16 %v1704
    %v1875 = vunpack.c.h.b16 %v1704
    %v1876 = vunpack.c.l.b16 %v1705
    %v1877 = vunpack.c.h.b16 %v1705
    %v1878 = vunpack.c.l.b16 %v1706
    %v1879 = vunpack.c.h.b16 %v1706
    %v1880 = vunpack.c.l.b16 %v1707
    %v1881 = vunpack.c.h.b16 %v1707
    %v1882 = vunpack.c.l.b16 %v1708
    %v1883 = vunpack.c.h.b16 %v1708
    %v1884 = vunpack.c.l.b16 %v1709
    %v1885 = vunpack.c.h.b16 %v1709
    %v1886 = vunpack.c.l.b16 %v1710
    %v1887 = vunpack.c.h.b16 %v1710
    %v1888 = vunpack.c.l.b16 %v1711
    %v1889 = vunpack.c.h.b16 %v1711
    %v1890 = vunpack.c.l.b16 %v1712
    %v1891 = vunpack.c.h.b16 %v1712
    %v1892 = vunpack.c.l.b16 %v1713
    %v1893 = vunpack.c.h.b16 %v1713
    %v1894 = vunpack.c.l.b16 %v1714
    %v1895 = vunpack.c.h.b16 %v1714
    %v1896 = vunpack.c.l.b16 %v1715
    %v1897 = vunpack.c.h.b16 %v1715
    %v1898 = vunpack.c.l.b16 %v1716
    %v1899 = vunpack.c.h.b16 %v1716
    %v1900 = vunpack.c.l.b16 %v1717
    %v1901 = vunpack.c.h.b16 %v1717
    %v1902 = vunpack.c.l.b16 %v1718
    %v1903 = vunpack.c.h.b16 %v1718
    %v1904 = vunpack.c.l.b16 %v1719
    %v1905 = vunpack.c.h.b16 %v1719
    %v1906 = vunpack.c.l.b16 %v1720
    %v1907 = vunpack.c.h.b16 %v1720
    %v1908 = vunpack.c.l.b16 %v1721
    %v1909 = vunpack.c.h.b16 %v1721
    %v1910 = vunpack.c.l.b16 %v1722
    %v1911 = vunpack.c.h.b16 %v1722
    %v1912 = vunpack.c.l.b16 %v1723
    %v1913 = vunpack.c.h.b16 %v1723
    %v1914 = vunpack.c.l.b16 %v1724
    %v1915 = vunpack.c.h.b16 %v1724
    %v1916 = vunpack.c.l.b16 %v1725
    %v1917 = vunpack.c.h.b16 %v1725
    %v1918 = vunpack.c.l.b16 %v1726
    %v1919 = vunpack.c.h.b16 %v1726
    %v1920 = vunpack.c.l.b16 %v1727
    %v1921 = vunpack.c.h.b16 %v1727
    %v1922 = vunpack.c.l.b16 %v1728
    %v1923 = vunpack.c.h.b16 %v1728
    %v1924 = vunpack.c.l.b16 %v1729
    %v1925 = vunpack.c.h.b16 %v1729
    %v1926 = vunpack.c.l.b16 %v1730
    %v1927 = vunpack.c.h.b16 %v1730
    %v1928 = vunpack.c.l.b16 %v1731
    %v1929 = vunpack.c.h.b16 %v1731
    %v1930 = vunpack.c.l.b16 %v1732
    %v1931 = vunpack.c.h.b16 %v1732
    %v1932 = vunpack.c.l.b16 %v1733
    %v1933 = vunpack.c.h.b16 %v1733
    %v1934 = vunpack.c.l.b16 %v1734
    %v1935 = vunpack.c.h.b16 %v1734
    %v1936 = vunpack.c.l.b16 %v1735
    %v1937 = vunpack.c.h.b16 %v1735
    %v1938 = vunpack.c.l.b16 %v1736
    %v1939 = vunpack.c.h.b16 %v1736
    %v1940 = vunpack.c.l.b16 %v1737
    %v1941 = vunpack.c.h.b16 %v1737
    %v1942 = vpack.c.b16 %v1816, %v1814
    %v1943 = vpack.c.b16 %v1817, %v1815
    %v1944 = vpack.c.b16 %v1820, %v1818
    %v1945 = vpack.c.b16 %v1821, %v1819
    %v1946 = vpack.c.b16 %v1824, %v1822
    %v1947 = vpack.c.b16 %v1825, %v1823
    %v1948 = vpack.c.b16 %v1828, %v1826
    %v1949 = vpack.c.b16 %v1829, %v1827
    %v1950 = vpack.c.b16 %v1832, %v1830
    %v1951 = vpack.c.b16 %v1833, %v1831
    %v1952 = vpack.c.b16 %v1836, %v1834
    %v1953 = vpack.c.b16 %v1837, %v1835
    %v1954 = vpack.c.b16 %v1840, %v1838
    %v1955 = vpack.c.b16 %v1841, %v1839
    %v1956 = vpack.c.b16 %v1844, %v1842
    %v1957 = vpack.c.b16 %v1845, %v1843
    %v1958 = vpack.c.b16 %v1848, %v1846
    %v1959 = vpack.c.b16 %v1849, %v1847
    %v1960 = vpack.c.b16 %v1852, %v1850
    %v1961 = vpack.c.b16 %v1853, %v1851
    %v1962 = vpack.c.b16 %v1856, %v1854
    %v1963 = vpack.c.b16 %v1857, %v1855
    %v1964 = vpack.c.b16 %v1860, %v1858
    %v1965 = vpack.c.b16 %v1861, %v1859
    %v1966 = vpack.c.b16 %v1864, %v1862
    %v1967 = vpack.c.b16 %v1865, %v1863
    %v1968 = vpack.c.b16 %v1868, %v1866
    %v1969 = vpack.c.b16 %v1869, %v1867
    %v1970 = vpack.c.b16 %v1872, %v1870
    %v1971 = vpack.c.b16 %v1873, %v1871
    %v1972 = vpack.c.b16 %v1876, %v1874
    %v1973 = vpack.c.b16 %v1877, %v1875
    %v1974 = vpack.c.b16 %v1880, %v1878
    %v1975 = vpack.c.b16 %v1881, %v1879
    %v1976 = vpack.c.b16 %v1884, %v1882
    %v1977 = vpack.c.b16 %v1885, %v1883
    %v1978 = vpack.c.b16 %v1888, %v1886
    %v1979 = vpack.c.b16 %v1889, %v1887
    %v1980 = vpack.c.b16 %v1892, %v1890
    %v1981 = vpack.c.b16 %v1893, %v1891
    %v1982 = vpack.c.b16 %v1896, %v1894
    %v1983 = vpack.c.b16 %v1897, %v1895
    %v1984 = vpack.c.b16 %v1900, %v1898
    %v1985 = vpack.c.b16 %v1901, %v1899
    %v1986 = vpack.c.b16 %v1904, %v1902
    %v1987 = vpack.c.b16 %v1905, %v1903
    %v1988 = vpack.c.b16 %v1908, %v1906
    %v1989 = vpack.c.b16 %v1909, %v1907
    %v1990 = vpack.c.b16 %v1912, %v1910
    %v1991 = vpack.c.b16 %v1913, %v1911
    %v1992 = vpack.c.b16 %v1916, %v1914
    %v1993 = vpack.c.b16 %v1917, %v1915
    %v1994 = vpack.c.b16 %v1920, %v1918
    %v1995 = vpack.c.b16 %v1921, %v1919
    %v1996 = vpack.c.b16 %v1924, %v1922
    %v1997 = vpack.c.b16 %v1925, %v1923
    %v1998 = vpack.c.b16 %v1928, %v1926
    %v1999 = vpack.c.b16 %v1929, %v1927
    %v2000 = vpack.c.b16 %v1932, %v1930
    %v2001 = vpack.c.b16 %v1933, %v1931
    %v2002 = vpack.c.b16 %v1936, %v1934
    %v2003 = vpack.c.b16 %v1937, %v1935
    %v2004 = vpack.c.b16 %v1940, %v1938
    %v2005 = vpack.c.b16 %v1941, %v1939
    %2070 = vmatprep.subr.bf16.mxu0 %v1943
    %2071 = vmatpush1.bf16.msra.mxu0 %v1942
    %2072 = vmatprep.subr.bf16.mxu0 %v1945
    %2073 = vmatpush1.bf16.msra.mxu0 %v1944
    %2074 = vmatprep.subr.bf16.mxu0 %v1947
    %2075 = vmatpush1.bf16.msra.mxu0 %v1946
    %2076 = vmatprep.subr.bf16.mxu0 %v1949
    %2077 = vmatpush1.bf16.msra.mxu0 %v1948
    %2078 = vmatprep.subr.bf16.mxu0 %v1951
    %2079 = vmatpush1.bf16.msra.mxu0 %v1950
    %2080 = vmatprep.subr.bf16.mxu0 %v1953
    %2081 = vmatpush1.bf16.msra.mxu0 %v1952
    %2082 = vmatprep.subr.bf16.mxu0 %v1955
    %2083 = vmatpush1.bf16.msra.mxu0 %v1954
    %2084 = vmatprep.subr.bf16.mxu0 %v1957
    %2085 = vmatpush1.bf16.msra.mxu0 %v1956
    %2086 = vmatprep.subr.bf16.mxu0 %v1959
    %2087 = vmatpush1.bf16.msra.mxu0 %v1958
    %2088 = vmatprep.subr.bf16.mxu0 %v1961
    %2089 = vmatpush1.bf16.msra.mxu0 %v1960
    %2090 = vmatprep.subr.bf16.mxu0 %v1963
    %2091 = vmatpush1.bf16.msra.mxu0 %v1962
    %2092 = vmatprep.subr.bf16.mxu0 %v1965
    %2093 = vmatpush1.bf16.msra.mxu0 %v1964
    %2094 = vmatprep.subr.bf16.mxu0 %v1967
    %2095 = vmatpush1.bf16.msra.mxu0 %v1966
    %2096 = vmatprep.subr.bf16.mxu0 %v1969
    %2097 = vmatpush1.bf16.msra.mxu0 %v1968
    %2098 = vmatprep.subr.bf16.mxu0 %v1971
    %2099 = vmatpush1.bf16.msra.mxu0 %v1970
    %2100 = vmatprep.subr.bf16.mxu0 %v1973
    %2101 = vmatpush1.bf16.msra.mxu0 %v1972
    %2102 = vmatprep.mubr.bf16.mxu0 %v1671
    %2103 = vmatmul.mubr.bf16.gmra.mrb[0].mxu0 %v1670
    %v2104 = vpop.f32.mrb[0].mxu0
    %v2105 = vadd.f32 %v1743, %v2104
    %v2106 = vpop.f32.mrb[0].mxu0
    %v2107 = vadd.f32 %v1747, %v2106
    %v2108 = vpop.f32.mrb[0].mxu0
    %v2109 = vadd.f32 %v1743, %v2108
    %v2110 = vpop.f32.mrb[0].mxu0
    %v2111 = vadd.f32 %v1747, %v2110
    %2112 = vdwg.mxu0
    %2113 = vmatprep.subr.bf16.mxu0 %v1975
    %2114 = vmatpush1.bf16.msra.mxu0 %v1974
    %2115 = vmatprep.subr.bf16.mxu0 %v1977
    %2116 = vmatpush1.bf16.msra.mxu0 %v1976
    %2117 = vmatprep.subr.bf16.mxu0 %v1979
    %2118 = vmatpush1.bf16.msra.mxu0 %v1978
    %2119 = vmatprep.subr.bf16.mxu0 %v1981
    %2120 = vmatpush1.bf16.msra.mxu0 %v1980
    %2121 = vmatprep.subr.bf16.mxu0 %v1983
    %2122 = vmatpush1.bf16.msra.mxu0 %v1982
    %2123 = vmatprep.subr.bf16.mxu0 %v1985
    %2124 = vmatpush1.bf16.msra.mxu0 %v1984
    %2125 = vmatprep.subr.bf16.mxu0 %v1987
    %2126 = vmatpush1.bf16.msra.mxu0 %v1986
    %2127 = vmatprep.subr.bf16.mxu0 %v1989
    %2128 = vmatpush1.bf16.msra.mxu0 %v1988
    %2129 = vmatprep.subr.bf16.mxu0 %v1991
    %2130 = vmatpush1.bf16.msra.mxu0 %v1990
    %2131 = vmatprep.subr.bf16.mxu0 %v1993
    %2132 = vmatpush1.bf16.msra.mxu0 %v1992
    %2133 = vmatprep.subr.bf16.mxu0 %v1995
    %2134 = vmatpush1.bf16.msra.mxu0 %v1994
    %2135 = vmatprep.subr.bf16.mxu0 %v1997
    %2136 = vmatpush1.bf16.msra.mxu0 %v1996
    %2137 = vmatprep.subr.bf16.mxu0 %v1999
    %2138 = vmatpush1.bf16.msra.mxu0 %v1998
    %2139 = vmatprep.subr.bf16.mxu0 %v2001
    %2140 = vmatpush1.bf16.msra.mxu0 %v2000
    %2141 = vmatprep.subr.bf16.mxu0 %v2003
    %2142 = vmatpush1.bf16.msra.mxu0 %v2002
    %2143 = vmatprep.subr.bf16.mxu0 %v2005
    %2144 = vmatpush1.bf16.msra.mxu0 %v2004
    %2145 = vmatprep.mubr.bf16.mxu0 %v1673
    %2146 = vmatmul.mubr.bf16.gmra.mrb[0].mxu0 %v1672
    %v2147 = vpop.f32.mrb[0].mxu0
    %v2148 = vadd.f32 %v2105, %v2147
    %v2149 = vpop.f32.mrb[0].mxu0
    %v2150 = vadd.f32 %v2107, %v2149
    %v2151 = vpop.f32.mrb[0].mxu0
    %v2152 = vadd.f32 %v2109, %v2151
    %v2153 = vpop.f32.mrb[0].mxu0
    %v2154 = vadd.f32 %v2111, %v2153
    %2155 = vdwg.mxu0
    %v2156 = vmax.f32 %v2148, 0.0
    %v2157 = vmax.f32 %v2150, 0.0
    %v2158 = vmax.f32 %v2152, 0.0
    %v2159 = vmax.f32 %v2154, 0.0
    %v2160 = vpack.c.bf16 %v2158, %v2156
    %v2161 = vpack.c.bf16 %v2159, %v2157
    %v2162 = vld [vmem:[#allocation8] sm:$0xf]
    %v2163 = vld [vmem:[#allocation8 + $0x4] sm:$0xf]
    %v2164 = vld [vmem:[#allocation8 + $0x8] sm:$0xf]
    %v2165 = vld [vmem:[#allocation8 + $0xc] sm:$0xf]
    %v2166 = vld [vmem:[#allocation8 + $0x10] sm:$0xf]
    %v2167 = vld [vmem:[#allocation8 + $0x14] sm:$0xf]
    %v2168 = vld [vmem:[#allocation8 + $0x18] sm:$0xf]
    %v2169 = vld [vmem:[#allocation8 + $0x1c] sm:$0xf]
    %v2170 = vld [vmem:[#allocation8 + $0x20] sm:$0xf]
    %v2171 = vld [vmem:[#allocation8 + $0x24] sm:$0xf]
    %v2172 = vld [vmem:[#allocation8 + $0x28] sm:$0xf]
    %v2173 = vld [vmem:[#allocation8 + $0x2c] sm:$0xf]
    %v2174 = vld [vmem:[#allocation8 + $0x30] sm:$0xf]
    %v2175 = vld [vmem:[#allocation8 + $0x34] sm:$0xf]
    %v2176 = vld [vmem:[#allocation8 + $0x38] sm:$0xf]
    %v2177 = vld [vmem:[#allocation8 + $0x3c] sm:$0xf]
    %v2178 = vld [vmem:[#allocation8 + $0x40] sm:$0xf]
    %v2179 = vld [vmem:[#allocation8 + $0x44] sm:$0xf]
    %v2180 = vld [vmem:[#allocation8 + $0x48] sm:$0xf]
    %v2181 = vld [vmem:[#allocation8 + $0x4c] sm:$0xf]
    %v2182 = vld [vmem:[#allocation8 + $0x50] sm:$0xf]
    %v2183 = vld [vmem:[#allocation8 + $0x54] sm:$0xf]
    %v2184 = vld [vmem:[#allocation8 + $0x58] sm:$0xf]
    %v2185 = vld [vmem:[#allocation8 + $0x5c] sm:$0xf]
    %v2186 = vld [vmem:[#allocation8 + $0x60] sm:$0xf]
    %v2187 = vld [vmem:[#allocation8 + $0x64] sm:$0xf]
    %v2188 = vld [vmem:[#allocation8 + $0x68] sm:$0xf]
    %v2189 = vld [vmem:[#allocation8 + $0x6c] sm:$0xf]
    %v2190 = vld [vmem:[#allocation8 + $0x70] sm:$0xf]
    %v2191 = vld [vmem:[#allocation8 + $0x74] sm:$0xf]
    %v2192 = vld [vmem:[#allocation8 + $0x78] sm:$0xf]
    %v2193 = vld [vmem:[#allocation8 + $0x7c] sm:$0xf]
    %v2194 = vld [vmem:[%s6] sm:$0x1]
    %v2196 = vlaneseq
    %v2197 = vshrl.u32 %v2196, 7
    %v2198 = vsub.s32 0, %v2197
    %v2199 = vrot.slane %v2194, %v2198
    %v2233 = vunpack.c.l.b16 %v2162
    %v2234 = vunpack.c.l.b16 %v2163
    %v2235 = vunpack.c.l.b16 %v2164
    %v2236 = vunpack.c.l.b16 %v2165
    %v2237 = vunpack.c.l.b16 %v2166
    %v2238 = vunpack.c.l.b16 %v2167
    %v2239 = vunpack.c.l.b16 %v2168
    %v2240 = vunpack.c.l.b16 %v2169
    %v2241 = vunpack.c.l.b16 %v2170
    %v2242 = vunpack.c.l.b16 %v2171
    %v2243 = vunpack.c.l.b16 %v2172
    %v2244 = vunpack.c.l.b16 %v2173
    %v2245 = vunpack.c.l.b16 %v2174
    %v2246 = vunpack.c.l.b16 %v2175
    %v2247 = vunpack.c.l.b16 %v2176
    %v2248 = vunpack.c.l.b16 %v2177
    %v2249 = vunpack.c.l.b16 %v2178
    %v2250 = vunpack.c.l.b16 %v2179
    %v2251 = vunpack.c.l.b16 %v2180
    %v2252 = vunpack.c.l.b16 %v2181
    %v2253 = vunpack.c.l.b16 %v2182
    %v2254 = vunpack.c.l.b16 %v2183
    %v2255 = vunpack.c.l.b16 %v2184
    %v2256 = vunpack.c.l.b16 %v2185
    %v2257 = vunpack.c.l.b16 %v2186
    %v2258 = vunpack.c.l.b16 %v2187
    %v2259 = vunpack.c.l.b16 %v2188
    %v2260 = vunpack.c.l.b16 %v2189
    %v2261 = vunpack.c.l.b16 %v2190
    %v2262 = vunpack.c.l.b16 %v2191
    %v2263 = vunpack.c.l.b16 %v2192
    %v2264 = vunpack.c.l.b16 %v2193
    %v2265 = vpack.c.b16 %v2234, %v2233
    %v2266 = vpack.c.b16 %v2236, %v2235
    %v2267 = vpack.c.b16 %v2238, %v2237
    %v2268 = vpack.c.b16 %v2240, %v2239
    %v2269 = vpack.c.b16 %v2242, %v2241
    %v2270 = vpack.c.b16 %v2244, %v2243
    %v2271 = vpack.c.b16 %v2246, %v2245
    %v2272 = vpack.c.b16 %v2248, %v2247
    %v2273 = vpack.c.b16 %v2250, %v2249
    %v2274 = vpack.c.b16 %v2252, %v2251
    %v2275 = vpack.c.b16 %v2254, %v2253
    %v2276 = vpack.c.b16 %v2256, %v2255
    %v2277 = vpack.c.b16 %v2258, %v2257
    %v2278 = vpack.c.b16 %v2260, %v2259
    %v2279 = vpack.c.b16 %v2262, %v2261
    %v2280 = vpack.c.b16 %v2264, %v2263
    %2297 = vmatprep.subr.bf16.mxu0 0
    %2298 = vmatpush1.bf16.msra.mxu0 %v2265
    %2299 = vmatprep.subr.bf16.mxu0 0
    %2300 = vmatpush1.bf16.msra.mxu0 %v2266
    %2301 = vmatprep.subr.bf16.mxu0 0
    %2302 = vmatpush1.bf16.msra.mxu0 %v2267
    %2303 = vmatprep.subr.bf16.mxu0 0
    %2304 = vmatpush1.bf16.msra.mxu0 %v2268
    %2305 = vmatprep.subr.bf16.mxu0 0
    %2306 = vmatpush1.bf16.msra.mxu0 %v2269
    %2307 = vmatprep.subr.bf16.mxu0 0
    %2308 = vmatpush1.bf16.msra.mxu0 %v2270
    %2309 = vmatprep.subr.bf16.mxu0 0
    %2310 = vmatpush1.bf16.msra.mxu0 %v2271
    %2311 = vmatprep.subr.bf16.mxu0 0
    %2312 = vmatpush1.bf16.msra.mxu0 %v2272
    %2313 = vmatprep.subr.bf16.mxu0 0
    %2314 = vmatpush1.bf16.msra.mxu0 %v2273
    %2315 = vmatprep.subr.bf16.mxu0 0
    %2316 = vmatpush1.bf16.msra.mxu0 %v2274
    %2317 = vmatprep.subr.bf16.mxu0 0
    %2318 = vmatpush1.bf16.msra.mxu0 %v2275
    %2319 = vmatprep.subr.bf16.mxu0 0
    %2320 = vmatpush1.bf16.msra.mxu0 %v2276
    %2321 = vmatprep.subr.bf16.mxu0 0
    %2322 = vmatpush1.bf16.msra.mxu0 %v2277
    %2323 = vmatprep.subr.bf16.mxu0 0
    %2324 = vmatpush1.bf16.msra.mxu0 %v2278
    %2325 = vmatprep.subr.bf16.mxu0 0
    %2326 = vmatpush1.bf16.msra.mxu0 %v2279
    %2327 = vmatprep.subr.bf16.mxu0 0
    %2328 = vmatpush1.bf16.msra.mxu0 %v2280
    %2329 = vmatprep.mubr.bf16.mxu0 %v2161
    %2330 = vmatmul.mubr.bf16.gmra.mrb[0].mxu0 %v2160
    %v2331 = vpop.f32.mrb[0].mxu0
    %v2332 = vadd.f32 %v2199, %v2331
    %v2333 = vpop.f32.mrb[0].mxu0
    %v2334 = vpop.f32.mrb[0].mxu0
    %v2335 = vadd.f32 %v2199, %v2334
    %v2336 = vpop.f32.mrb[0].mxu0
    %2337 = vdwg.mxu0
    %v2338 = vmax.f32 %v2332, 0.0
    %v2339 = vmax.f32 %v2335, 0.0
    %v2340 = vpack.c.bf16 %v2339, %v2338
    %v2341 = vld [vmem:[%s7] sm:$0xf]
    %v2342 = vld [vmem:[%s7 + $0x4] sm:$0xf]
    %v2343 = vld [vmem:[%s7 + $0x8] sm:$0xf]
    %v2344 = vld [vmem:[%s7 + $0xc] sm:$0xf]
    %v2345 = vld [vmem:[%s7 + $0x10] sm:$0xf]
    %v2346 = vld [vmem:[%s7 + $0x14] sm:$0xf]
    %v2347 = vld [vmem:[%s7 + $0x18] sm:$0xf]
    %v2348 = vld [vmem:[%s7 + $0x1c] sm:$0xf]
    %v2349 = vld [vmem:[%s7 + $0x20] sm:$0xf]
    %v2350 = vld [vmem:[%s7 + $0x24] sm:$0xf]
    %v2351 = vld [vmem:[%s7 + $0x28] sm:$0xf]
    %v2352 = vld [vmem:[%s7 + $0x2c] sm:$0xf]
    %v2353 = vld [vmem:[%s7 + $0x30] sm:$0xf]
    %v2354 = vld [vmem:[%s7 + $0x34] sm:$0xf]
    %v2355 = vld [vmem:[%s7 + $0x38] sm:$0xf]
    %v2356 = vld [vmem:[%s7 + $0x3c] sm:$0xf]
    %v2357 = vld [vmem:[%s8] sm:$0x1]
    %v2359 = vlaneseq
    %v2360 = vshrl.u32 %v2359, 7
    %v2361 = vsub.s32 0, %v2360
    %v2362 = vrot.slane %v2357, %v2361
    %v2380 = vunpack.c.l.b16 %v2341
    %v2381 = vunpack.c.l.b16 %v2342
    %v2382 = vunpack.c.l.b16 %v2343
    %v2383 = vunpack.c.l.b16 %v2344
    %v2384 = vunpack.c.l.b16 %v2345
    %v2385 = vunpack.c.l.b16 %v2346
    %v2386 = vunpack.c.l.b16 %v2347
    %v2387 = vunpack.c.l.b16 %v2348
    %v2388 = vunpack.c.l.b16 %v2349
    %v2389 = vunpack.c.l.b16 %v2350
    %v2390 = vunpack.c.l.b16 %v2351
    %v2391 = vunpack.c.l.b16 %v2352
    %v2392 = vunpack.c.l.b16 %v2353
    %v2393 = vunpack.c.l.b16 %v2354
    %v2394 = vunpack.c.l.b16 %v2355
    %v2395 = vunpack.c.l.b16 %v2356
    %v2396 = vpack.c.b16 %v2381, %v2380
    %v2397 = vpack.c.b16 %v2383, %v2382
    %v2398 = vpack.c.b16 %v2385, %v2384
    %v2399 = vpack.c.b16 %v2387, %v2386
    %v2400 = vpack.c.b16 %v2389, %v2388
    %v2401 = vpack.c.b16 %v2391, %v2390
    %v2402 = vpack.c.b16 %v2393, %v2392
    %v2403 = vpack.c.b16 %v2395, %v2394
    %2412 = vmatprep.subr.bf16.mxu0 0
    %2413 = vmatpush1.bf16.msra.mxu0 %v2396
    %2414 = vmatprep.subr.bf16.mxu0 0
    %2415 = vmatpush1.bf16.msra.mxu0 %v2397
    %2416 = vmatprep.subr.bf16.mxu0 0
    %2417 = vmatpush1.bf16.msra.mxu0 %v2398
    %2418 = vmatprep.subr.bf16.mxu0 0
    %2419 = vmatpush1.bf16.msra.mxu0 %v2399
    %2420 = vmatprep.subr.bf16.mxu0 0
    %2421 = vmatpush1.bf16.msra.mxu0 %v2400
    %2422 = vmatprep.subr.bf16.mxu0 0
    %2423 = vmatpush1.bf16.msra.mxu0 %v2401
    %2424 = vmatprep.subr.bf16.mxu0 0
    %2425 = vmatpush1.bf16.msra.mxu0 %v2402
    %2426 = vmatprep.subr.bf16.mxu0 0
    %2427 = vmatpush1.bf16.msra.mxu0 %v2403
    %2428 = vmatprep.subr.bf16.mxu0 0
    %2429 = vmatpush1.bf16.msra.mxu0 0
    %2430 = vmatprep.subr.bf16.mxu0 0
    %2431 = vmatpush1.bf16.msra.mxu0 0
    %2432 = vmatprep.subr.bf16.mxu0 0
    %2433 = vmatpush1.bf16.msra.mxu0 0
    %2434 = vmatprep.subr.bf16.mxu0 0
    %2435 = vmatpush1.bf16.msra.mxu0 0
    %2436 = vmatprep.subr.bf16.mxu0 0
    %2437 = vmatpush1.bf16.msra.mxu0 0
    %2438 = vmatprep.subr.bf16.mxu0 0
    %2439 = vmatpush1.bf16.msra.mxu0 0
    %2440 = vmatprep.subr.bf16.mxu0 0
    %2441 = vmatpush1.bf16.msra.mxu0 0
    %2442 = vmatprep.subr.bf16.mxu0 0
    %2443 = vmatpush1.bf16.msra.mxu0 0
    %2444 = vmatprep.mubr.bf16.mxu0 0
    %2445 = vmatmul.mubr.bf16.gmra.mrb[0].mxu0 %v2340
    %v2446 = vpop.f32.mrb[0].mxu0
    %v2447 = vadd.f32 %v2362, %v2446
    %v2448 = vpop.f32.mrb[0].mxu0
    %v2449 = vpop.f32.mrb[0].mxu0
    %v2450 = vadd.f32 %v2362, %v2449
    %v2451 = vpop.f32.mrb[0].mxu0
    %2452 = vdwg.mxu0
    %v2453 = vmax.f32 %v2447, 0.0
    %v2454 = vmax.f32 %v2450, 0.0
    %v2455 = vpack.c.bf16 %v2454, %v2453
    %v2456 = vld [vmem:[%s9] sm:$0xf]
    %v2457 = vld [vmem:[%s9 + $0x4] sm:$0xf]
    %v2458 = vld [vmem:[%s9 + $0x8] sm:$0xf]
    %v2459 = vld [vmem:[%s9 + $0xc] sm:$0xf]
    %v2460 = vld [vmem:[%s9 + $0x10] sm:$0xf]
    %v2461 = vld [vmem:[%s9 + $0x14] sm:$0xf]
    %v2462 = vld [vmem:[%s9 + $0x18] sm:$0xf]
    %v2463 = vld [vmem:[%s9 + $0x1c] sm:$0xf]
    %v2464 = vld [vmem:[%s10] sm:$0x1]
    %v2466 = vlaneseq
    %v2467 = vshrl.u32 %v2466, 7
    %v2468 = vsub.s32 0, %v2467
    %v2469 = vrot.slane %v2464, %v2468
    %v2479 = vunpack.c.l.b16 %v2456
    %v2480 = vunpack.c.l.b16 %v2457
    %v2481 = vunpack.c.l.b16 %v2458
    %v2482 = vunpack.c.l.b16 %v2459
    %v2483 = vunpack.c.l.b16 %v2460
    %v2484 = vunpack.c.l.b16 %v2461
    %v2485 = vunpack.c.l.b16 %v2462
    %v2486 = vunpack.c.l.b16 %v2463
    %v2487 = vpack.c.b16 %v2480, %v2479
    %v2488 = vpack.c.b16 %v2482, %v2481
    %v2489 = vpack.c.b16 %v2484, %v2483
    %v2490 = vpack.c.b16 %v2486, %v2485
    %vm2495 = vcmask 523264
    %v2497 = vsel %vm2495, %v2455, 0
    %2499 = vmatprep.subr.bf16.mxu0 0
    %2500 = vmatpush1.bf16.msra.mxu0 %v2487
    %2501 = vmatprep.subr.bf16.mxu0 0
    %2502 = vmatpush1.bf16.msra.mxu0 %v2488
    %2503 = vmatprep.subr.bf16.mxu0 0
    %2504 = vmatpush1.bf16.msra.mxu0 %v2489
    %2505 = vmatprep.subr.bf16.mxu0 0
    %2506 = vmatpush1.bf16.msra.mxu0 %v2490
    %2507 = vmatprep.subr.bf16.mxu0 0
    %2508 = vmatpush1.bf16.msra.mxu0 0
    %2509 = vmatprep.subr.bf16.mxu0 0
    %2510 = vmatpush1.bf16.msra.mxu0 0
    %2511 = vmatprep.subr.bf16.mxu0 0
    %2512 = vmatpush1.bf16.msra.mxu0 0
    %2513 = vmatprep.subr.bf16.mxu0 0
    %2514 = vmatpush1.bf16.msra.mxu0 0
    %2515 = vmatprep.subr.bf16.mxu0 0
    %2516 = vmatpush1.bf16.msra.mxu0 0
    %2517 = vmatprep.subr.bf16.mxu0 0
    %2518 = vmatpush1.bf16.msra.mxu0 0
    %2519 = vmatprep.subr.bf16.mxu0 0
    %2520 = vmatpush1.bf16.msra.mxu0 0
    %2521 = vmatprep.subr.bf16.mxu0 0
    %2522 = vmatpush1.bf16.msra.mxu0 0
    %2523 = vmatprep.subr.bf16.mxu0 0
    %2524 = vmatpush1.bf16.msra.mxu0 0
    %2525 = vmatprep.subr.bf16.mxu0 0
    %2526 = vmatpush1.bf16.msra.mxu0 0
    %2527 = vmatprep.subr.bf16.mxu0 0
    %2528 = vmatpush1.bf16.msra.mxu0 0
    %2529 = vmatprep.subr.bf16.mxu0 0
    %2530 = vmatpush1.bf16.msra.mxu0 0
    %2531 = vmatprep.mubr.bf16.mxu0 0
    %2532 = vmatmul.mubr.bf16.gmra.mrb[0].mxu0 %v2497
    %v2533 = vpop.f32.mrb[0].mxu0
    %v2534 = vadd.f32 %v2469, %v2533
    %v2535 = vpop.f32.mrb[0].mxu0
    %v2536 = vpop.f32.mrb[0].mxu0
    %v2537 = vadd.f32 %v2469, %v2536
    %v2538 = vpop.f32.mrb[0].mxu0
    %2539 = vdwg.mxu0
    %v2540 = vpack.c.bf16 %v2537, %v2534
    %v2542 = vunpack.c.l.b16 %v2540
    %v2543 = vunpack.c.h.b16 %v2540
    %v2544 = vpack.c.b16 %v2542, %v2542
    %v2545 = vpack.c.b16 %v2543, %v2543
    %2548 = vst [vmem:[#allocation10] sm:$0xf] %v2544
    %2549 = vst [vmem:[#allocation10 + $0x4] sm:$0xf] %v2545
    // Predicated region
    $region62: #{tpu_custom_call.1} parent=1 // pred_check
      _
    $region63: #{tpu_custom_call.1} parent=1 // pred_check_branch
      %2551 = sbr.rel (0) target = $region65
    $region64: #{tpu_custom_call.1} parent=1 // pred_region
      %s2553 = ssub.s32 128, 128
      %2554 = vsyncadd [#allocation4], %s2553
      %s2555 = sshll.u32 [#allocation10], 4
      %s2556 = int_to_ptr.vmem [resolvable:$true] %s2555
      %2561 = dma.vmem_to_hbm [thread:$0]  %s2556, 128, %s11, [#allocation4], 64, 64, 4
    $region65: #{tpu_custom_call.1} parent=1 // pred_fallthru
      _
    // Predicated region
    $region66: #{tpu_custom_call.1} parent=1 // pred_check
      _
    $region67: #{tpu_custom_call.1} parent=1 // pred_check_branch
      %2563 = sbr.rel (0) target = $region69
    $region68: #{tpu_custom_call.1} parent=1 // pred_region
      %2564 = dma.done [#allocation4], 128
    $region69: #{tpu_custom_call.1} parent=1 // pred_fallthru
      _
    %2565 = vsyncpa [#allocation3], 1
    %2566 = vsyncpa [#allocation6], 1
    %2567 = vsyncpa [#allocation9], 1
    %2568 = vsyncpa [#allocation4], 1

</llo_original>
